<compile_context>
chip_gen: v6e
topology: v6e:2x2x1
jax: 0.10.0
libtpu: 0.0.40
codegen_flags: <defaults>
</compile_context>

<pallas_src>
import functools

import jax
import jax.numpy as jnp
from jax import lax
from jax.experimental import pallas as pl
from jax.experimental.pallas import tpu as pltpu

_NEG = -1e30      # class-column padding -> padded classes vanish under softmax
_BIG = 1e30       # cache-row padding -> padded entries never win the nearest-neighbour
_LANE = 128
_SUBLANE = 8


def _round_up(n, m):
    return ((n + m - 1) // m) * m


def _stateful_classifier_kernel(threshold, x_ref, ct_ref, csq_ref, cp_ref,
                                w_ref, b_ref, probs_ref, hit_ref,
                                min_sc, best_sc):
    mi = pl.program_id(1)

    @pl.when(mi == 0)
    def _init():
        min_sc[...] = jnp.full_like(min_sc, _BIG)
        best_sc[...] = jnp.zeros_like(best_sc)

    x = x_ref[...]            # (TB, D)   f32 flattened query tile (resident across mi)

    # --- state_module.resultsTopk(x, 1), Gram form with -2 folded into the cache:
    #     partial_m = -2 x.c_m + ||c_m||^2 ; ||x||^2 added only on the (TB,1) minimum.
    partial = jnp.dot(x, ct_ref[...],
                      preferred_element_type=jnp.float32) + csq_ref[...]   # (TB, TM)

    local_min = jnp.min(partial, axis=-1, keepdims=True)                   # (TB, 1)
    tm = partial.shape[1]
    iota_m = lax.broadcasted_iota(jnp.int32, partial.shape, 1)
    # first index attaining the minimum (ties -> lowest index, matches torch argmin)
    first_idx = jnp.min(jnp.where(partial <= local_min, iota_m, jnp.int32(tm)),
                        axis=-1, keepdims=True)                            # (TB, 1)
    onehot = (iota_m == first_idx).astype(jnp.float32)                     # (TB, TM)
    local_best = jnp.dot(onehot, cp_ref[...],
                         preferred_element_type=jnp.float32)               # (TB, Kp)

    # running min across M-tiles; strict '<' keeps the earliest index on exact ties
    better = local_min < min_sc[...]                                       # (TB, 1)
    min_sc[...] = jnp.where(better, local_min, min_sc[...])
    best_sc[...] = jnp.where(better, local_best, best_sc[...])

    @pl.when(mi == pl.num_programs(1) - 1)
    def _finalize():
        x_sq = jnp.sum(x * x, axis=-1, keepdims=True)                      # (TB, 1)
        min_dist = jnp.maximum(x_sq + min_sc[...], 0.0)                    # clamp cancellation
        hit = min_dist <= jnp.float32(threshold)                           # (TB, 1) bool

        # --- self.model(x): linear classifier, bf16 on the MXU, f32 accumulate
        model_logits = jnp.dot(x.astype(jnp.bfloat16), w_ref[...],
                               preferred_element_type=jnp.float32) + b_ref[...]

        # --- cache-hit selection (action != 'rejection_silent')
        logits = jnp.where(hit, best_sc[...], model_logits)                # (TB, Kp)

        # --- softmax(dim=1); padded columns hold NEG -> exp == 0
        mx = jnp.max(logits, axis=-1, keepdims=True)
        ex = jnp.exp(logits - mx)
        denom = jnp.sum(ex, axis=-1, keepdims=True)
        probs_ref[...] = ex * pl.reciprocal(denom, approx=True)            # EUP, not VALU

        hit_ref[...] = jnp.broadcast_to(hit, hit_ref.shape).astype(jnp.int8)


def stateful_classifier_forward(x_nchw, cache_x, cache_preds, w, b, threshold,
                                *, batch_tile=None, cache_tile=None):
    """x_nchw: (B, C, H, W) f32. Returns (probs (B, K) f32, is_cache (B, 1) int8)."""
    B = x_nchw.shape[0]
    D = x_nchw.shape[1] * x_nchw.shape[2] * x_nchw.shape[3]
    M, K = cache_preds.shape

    # --- tile selection --------------------------------------------------------------
    if batch_tile is None:
        # B <= 128: keep the tile small enough that the parallel batch axis can have
        # >= 2 grid steps (v7x has 2 TensorCores); large B: taller tiles amortise the
        # ~0.35us per-step overhead (raise to 512 on v6e's 128 MiB VMEM if desired).
        batch_tile = min(64, _round_up(max(B, 1), _SUBLANE)) if B <= 128 else 256
    TB = batch_tile
    B_pad = _round_up(max(B, 1), TB)

    if cache_tile is None:
        cache_tile = min(512, _round_up(max(M, 1), _LANE))
    TM = cache_tile
    assert TM % _LANE == 0, "cache_tile must be a multiple of 128 lanes"
    M_pad = _round_up(max(M, 1), TM)
    K_pad = _round_up(K, _LANE)

    # --- pad / pre-transform the frozen operands (cache is frozen for this call) ----
    x_flat = x_nchw.reshape(B, D).astype(jnp.float32)
    x_pad = jnp.zeros((B_pad, D), jnp.float32).at[:B].set(x_flat)

    cache_f32 = cache_x.astype(jnp.float32)
    # pre-transposed and pre-scaled cache: canonical (TB,D)x(D,TM) matmul per tile,
    # no per-tile transpose, no per-tile "*2" VPU pass.
    ct_pad = jnp.zeros((D, M_pad), jnp.float32).at[:, :M].set(-2.0 * cache_f32.T)
    # ||cache||^2 precomputed once; padded rows get +BIG so they never win the argmin.
    csq_pad = jnp.full((1, M_pad), _BIG, jnp.float32).at[0, :M].set(
        jnp.sum(cache_f32 * cache_f32, axis=-1))
    cp_pad = jnp.full((M_pad, K_pad), _NEG, jnp.float32).at[:M, :K].set(
        cache_preds.astype(jnp.float32))

    w_pad = jnp.zeros((D, K_pad), jnp.bfloat16).at[:, :K].set(w.astype(jnp.bfloat16))
    b_pad = jnp.full((1, K_pad), _NEG, jnp.float32).at[0, :K].set(
        b.reshape(-1).astype(jnp.float32))

    n_b = B_pad // TB
    n_m = M_pad // TM
    resident = lambda i, mi: (0, 0)   # W / bias stay in VMEM for the whole grid

    # --- VMEM budget (double-buffered streamed inputs + resident W/bias + scratch) ---
    db = 2
    vmem_bytes = (TB * D * 4 * db                 # x tile
                  + D * TM * 4 * db               # -2*cache.T tile
                  + _SUBLANE * TM * 4 * db        # ||cache||^2 tile (sublane-padded)
                  + TM * K_pad * 4 * db           # cached-logits tile
                  + D * K_pad * 2 * db            # W (bf16, resident)
                  + _SUBLANE * K_pad * 4 * db     # bias
                  + TB * K_pad * 4 * db           # probs out
                  + TB * _LANE * 1 * db           # hit out (int8)
                  + TB * _LANE * 4 + TB * K_pad * 4)   # scratch accumulators
    vmem_limit = int(min(64 * 2**20, max(32 * 2**20, 1.5 * vmem_bytes)))

    flops = int(2 * B_pad * M_pad * D          # distance matmul
                + 2 * B_pad * M_pad * K_pad    # onehot gather matmul
                + 2 * B_pad * D * K_pad        # model matmul
                + 6 * B_pad * M_pad)           # elementwise over the (B, M) tile
    bytes_accessed = int(4 * B_pad * D
                         + n_b * 4 * (D * M_pad + M_pad + M_pad * K_pad)
                         + 2 * D * K_pad + 4 * K_pad
                         + 4 * B_pad * K_pad + B_pad * _LANE)

    probs_pad, hit_pad = pl.pallas_call(
        functools.partial(_stateful_classifier_kernel, float(threshold)),
        grid=(n_b, n_m),
        in_specs=[
            pl.BlockSpec((TB, D), lambda i, mi: (i, 0)),       # x: per batch tile
            pl.BlockSpec((D, TM), lambda i, mi: (0, mi)),      # -2*cache.T: streamed over M
            pl.BlockSpec((1, TM), lambda i, mi: (0, mi)),      # ||cache||^2: streamed over M
            pl.BlockSpec((TM, K_pad), lambda i, mi: (mi, 0)),  # cached logits: streamed over M
            pl.BlockSpec((D, K_pad), resident),                # W (bf16): resident
            pl.BlockSpec((1, K_pad), resident),                # bias: resident
        ],
        out_specs=(
            pl.BlockSpec((TB, K_pad), lambda i, mi: (i, 0)),   # lane-dense probs
            pl.BlockSpec((TB, _LANE), lambda i, mi: (i, 0)),   # lane-dense int8 hit flags
        ),
        out_shape=(
            jax.ShapeDtypeStruct((B_pad, K_pad), jnp.float32),
            jax.ShapeDtypeStruct((B_pad, _LANE), jnp.int8),
        ),
        scratch_shapes=[
            pltpu.VMEM((TB, 1), jnp.float32),       # running min of the distance partial
            pltpu.VMEM((TB, K_pad), jnp.float32),   # running best cached logits
        ],
        compiler_params=pltpu.CompilerParams(
            dimension_semantics=("parallel", "arbitrary"),
            vmem_limit_bytes=vmem_limit),
        cost_estimate=pl.CostEstimate(flops=flops,
                                      transcendentals=int(B_pad * K_pad),
                                      bytes_accessed=bytes_accessed),
    )(x_pad, ct_pad, csq_pad, cp_pad, w_pad, b_pad)

    return probs_pad[:B, :K], hit_pad[:B, :1]


def _reference(x_nchw, cache_x, cache_preds, w, b, threshold):
    B = x_nchw.shape[0]
    x_flat = x_nchw.reshape(B, -1).astype(jnp.float32)
    dists = jnp.sum((x_flat[:, None, :] - cache_x[None, :, :]) ** 2, axis=-1)
    idx = jnp.argmin(dists, axis=-1)
    min_dist = jnp.min(dists, axis=-1, keepdims=True)
    hit = min_dist <= threshold
    cached_logits = cache_preds[idx]
    model_logits = x_flat @ w + b
    logits = jnp.where(hit, cached_logits, model_logits)
    probs = jax.nn.softmax(logits, axis=1)
    return probs, hit.astype(jnp.int32)


if __name__ == "__main__":
    # Small, deterministic shapes consistent with the module's image-classifier use.
    B, C, H, W = 2, 4, 16, 16
    D = C * H * W            # 1024
    K = 10                   # num classes
    M = 16                   # cache entries
    threshold = 1.0          # hyperparameters['threshold']

    key = jax.random.PRNGKey(0)
    k_x, k_cache, k_cpred, k_w, k_b, k_noise = jax.random.split(key, 6)

    x = jax.random.normal(k_x, (B, C, H, W), dtype=jnp.float32)

    # Cache bank: entry 0 is a tiny perturbation of sample 0 (guaranteed cache hit),
    # the remaining entries are random (sample 1 should miss).
    cache_x = jax.random.normal(k_cache, (M, D), dtype=jnp.float32)
    cache_x = cache_x.at[0].set(
        x[0].reshape(-1) + 1e-3 * jax.random.normal(k_noise, (D,), dtype=jnp.float32))
    cache_preds = jax.random.normal(k_cpred, (M, K), dtype=jnp.float32)

    # Deterministic synthetic model parameters (linear classifier).
    w = (jax.random.normal(k_w, (D, K), dtype=jnp.float32) * 0.02)
    b = (jax.random.normal(k_b, (1, K), dtype=jnp.float32) * 0.1)

    probs, is_cache = stateful_classifier_forward(x, cache_x, cache_preds, w, b, threshold)
    probs = jax.block_until_ready(probs)
    is_cache = jax.block_until_ready(is_cache)

    ref_probs, ref_is_cache = _reference(x, cache_x, cache_preds, w, b, threshold)
    assert probs.shape == (B, K) and is_cache.shape == (B, 1)
    # bf16 model-logit path + approx reciprocal -> allow a few 1e-3 of slack on probs
    assert jnp.allclose(probs, ref_probs, atol=5e-3, rtol=5e-3)
    assert jnp.array_equal(is_cache, ref_is_cache)

    print("KERNEL_OK")
</pallas_src>

<mosaic_0001>
module attributes {stable_mosaic.version = 11 : i64} {
  func.func @_stateful_classifier_kernel(%arg0: i32, %arg1: i32, %arg2: memref<8x1024xf32, #tpu.memory_space<vmem>>, %arg3: memref<1024x128xf32, #tpu.memory_space<vmem>>, %arg4: memref<1x128xf32, #tpu.memory_space<vmem>>, %arg5: memref<128x128xf32, #tpu.memory_space<vmem>>, %arg6: memref<1024x128xbf16, #tpu.memory_space<vmem>>, %arg7: memref<1x128xf32, #tpu.memory_space<vmem>>, %arg8: memref<8x128xf32, #tpu.memory_space<vmem>>, %arg9: memref<8x128xi8, #tpu.memory_space<vmem>>, %arg10: memref<8x1xf32, #tpu.memory_space<vmem>>, %arg11: memref<8x128xf32, #tpu.memory_space<vmem>>) attributes {dimension_semantics = [#tpu.dimension_semantics<parallel>, #tpu.dimension_semantics<arbitrary>], iteration_bounds = array<i64: 1, 1>, scalar_prefetch = 0 : i64, scratch_operands = 2 : i64, tpu.core_type = #tpu.core_type<tc>, window_params = [{transform_indices = @transform_0, window_bounds = array<i64: 8, 1024>}, {transform_indices = @transform_1, window_bounds = array<i64: 1024, 128>}, {transform_indices = @transform_2, window_bounds = array<i64: 1, 128>}, {transform_indices = @transform_3, window_bounds = array<i64: 128, 128>}, {pipeline_mode = #tpu.pipeline_mode<synchronous>, transform_indices = @transform_4, window_bounds = array<i64: 1024, 128>}, {pipeline_mode = #tpu.pipeline_mode<synchronous>, transform_indices = @transform_5, window_bounds = array<i64: 1, 128>}, {transform_indices = @transform_6, window_bounds = array<i64: 8, 128>}, {transform_indices = @transform_7, window_bounds = array<i64: 8, 128>}]} {
    %c0_i32 = arith.constant 0 : i32
    %0 = arith.cmpi eq, %arg1, %c0_i32 : i32
    %1 = arith.extui %0 : i1 to i32
    %c0_i32_0 = arith.constant 0 : i32
    %2 = arith.cmpi ne, %1, %c0_i32_0 : i32
    scf.if %2 {
      %cst_23 = arith.constant 1.000000e+30 : f32
      %37 = vector.broadcast %cst_23 : f32 to vector<8x1xf32>
      %c0_24 = arith.constant 0 : index
      %c0_25 = arith.constant 0 : index
      %38 = vector.load %arg10[%c0_24, %c0_25] : memref<8x1xf32, #tpu.memory_space<vmem>>, vector<8x1xf32>
      tpu.vector_store %arg10[%c0_24, %c0_25], %37 {strides = array<i32>} : memref<8x1xf32, #tpu.memory_space<vmem>>, vector<8x1xf32>,
      %cst_26 = arith.constant 0.000000e+00 : f32
      %39 = vector.broadcast %cst_26 : f32 to vector<8x128xf32>
      %c0_27 = arith.constant 0 : index
      %c0_28 = arith.constant 0 : index
      %40 = vector.load %arg11[%c0_27, %c0_28] : memref<8x128xf32, #tpu.memory_space<vmem>>, vector<8x128xf32>
      tpu.vector_store %arg11[%c0_27, %c0_28], %39 {strides = array<i32>} : memref<8x128xf32, #tpu.memory_space<vmem>>, vector<8x128xf32>,
    } else {
    }
    %c0 = arith.constant 0 : index
    %c0_1 = arith.constant 0 : index
    %3 = vector.load %arg2[%c0, %c0_1] : memref<8x1024xf32, #tpu.memory_space<vmem>>, vector<8x1024xf32>
    %c0_2 = arith.constant 0 : index
    %c0_3 = arith.constant 0 : index
    %4 = vector.load %arg3[%c0_2, %c0_3] : memref<1024x128xf32, #tpu.memory_space<vmem>>, vector<1024x128xf32>
    %cst = arith.constant dense<0.000000e+00> : vector<8x128xf32>
    %5 = tpu.matmul %3, %4, %cst {dimension_numbers = #tpu.dot_dimension_numbers<[1], [0], [0], [1], [0, 0, 1, 1], [], []>} : vector<8x1024xf32>, vector<1024x128xf32>, vector<8x128xf32> -> vector<8x128xf32>
    %c0_4 = arith.constant 0 : index
    %c0_5 = arith.constant 0 : index
    %6 = vector.load %arg4[%c0_4, %c0_5] : memref<1x128xf32, #tpu.memory_space<vmem>>, vector<1x128xf32>
    %7 = vector.broadcast %6 : vector<1x128xf32> to vector<8x128xf32>
    %8 = arith.addf %5, %7 : vector<8x128xf32>
    %cst_6 = arith.constant dense<0x7F800000> : vector<8xf32>
    %9 = vector.multi_reduction <minimumf>, %8, %cst_6 [1] : vector<8x128xf32> to vector<8xf32>
    %10 = vector.shape_cast %9 : vector<8xf32> to vector<8x1xf32>
    %11 = tpu.iota {dimensions = array<i32: 1>} : vector<8x128xi32>
    %12 = vector.broadcast %10 : vector<8x1xf32> to vector<8x128xf32>
    %13 = arith.cmpf ole, %8, %12 : vector<8x128xf32>
    %c128_i32 = arith.constant 128 : i32
    %14 = vector.broadcast %c128_i32 : i32 to vector<8x128xi32>
    %15 = arith.select %13, %11, %14 : vector<8x128xi1>, vector<8x128xi32>
    %cst_7 = arith.constant dense<2147483647> : vector<8xi32>
    %16 = vector.multi_reduction <minsi>, %15, %cst_7 [1] : vector<8x128xi32> to vector<8xi32>
    %17 = vector.shape_cast %16 : vector<8xi32> to vector<8x1xi32>
    %18 = vector.broadcast %17 : vector<8x1xi32> to vector<8x128xi32>
    %19 = arith.cmpi eq, %11, %18 : vector<8x128xi32>
    %20 = arith.extui %19 : vector<8x128xi1> to vector<8x128xi32>
    %21 = arith.sitofp %20 : vector<8x128xi32> to vector<8x128xf32>
    %c0_8 = arith.constant 0 : index
    %c0_9 = arith.constant 0 : index
    %22 = vector.load %arg5[%c0_8, %c0_9] : memref<128x128xf32, #tpu.memory_space<vmem>>, vector<128x128xf32>
    %cst_10 = arith.constant dense<0.000000e+00> : vector<8x128xf32>
    %23 = tpu.matmul %21, %22, %cst_10 {dimension_numbers = #tpu.dot_dimension_numbers<[1], [0], [0], [1], [0, 0, 1, 1], [], []>} : vector<8x128xf32>, vector<128x128xf32>, vector<8x128xf32> -> vector<8x128xf32>
    %c0_11 = arith.constant 0 : index
    %c0_12 = arith.constant 0 : index
    %24 = vector.load %arg10[%c0_11, %c0_12] : memref<8x1xf32, #tpu.memory_space<vmem>>, vector<8x1xf32>
    %25 = arith.cmpf olt, %10, %24 : vector<8x1xf32>
    %c0_13 = arith.constant 0 : index
    %c0_14 = arith.constant 0 : index
    %26 = vector.load %arg10[%c0_13, %c0_14] : memref<8x1xf32, #tpu.memory_space<vmem>>, vector<8x1xf32>
    %27 = arith.select %25, %10, %26 : vector<8x1xi1>, vector<8x1xf32>
    %c0_15 = arith.constant 0 : index
    %c0_16 = arith.constant 0 : index
    %28 = vector.load %arg10[%c0_15, %c0_16] : memref<8x1xf32, #tpu.memory_space<vmem>>, vector<8x1xf32>
    tpu.vector_store %arg10[%c0_15, %c0_16], %27 {strides = array<i32>} : memref<8x1xf32, #tpu.memory_space<vmem>>, vector<8x1xf32>,
    %c0_17 = arith.constant 0 : index
    %c0_18 = arith.constant 0 : index
    %29 = vector.load %arg11[%c0_17, %c0_18] : memref<8x128xf32, #tpu.memory_space<vmem>>, vector<8x128xf32>
    %30 = vector.shape_cast %25 : vector<8x1xi1> to vector<8x1xi1>
    %31 = vector.broadcast %30 : vector<8x1xi1> to vector<8x128xi1>
    %32 = arith.select %31, %23, %29 : vector<8x128xi1>, vector<8x128xf32>
    %c0_19 = arith.constant 0 : index
    %c0_20 = arith.constant 0 : index
    %33 = vector.load %arg11[%c0_19, %c0_20] : memref<8x128xf32, #tpu.memory_space<vmem>>, vector<8x128xf32>
    tpu.vector_store %arg11[%c0_19, %c0_20], %32 {strides = array<i32>} : memref<8x128xf32, #tpu.memory_space<vmem>>, vector<8x128xf32>,
    %c0_i32_21 = arith.constant 0 : i32
    %34 = arith.cmpi eq, %arg1, %c0_i32_21 : i32
    %35 = arith.extui %34 : i1 to i32
    %c0_i32_22 = arith.constant 0 : i32
    %36 = arith.cmpi ne, %35, %c0_i32_22 : i32
    scf.if %36 {
      %37 = arith.mulf %3, %3 : vector<8x1024xf32>
      %cst_23 = arith.constant dense<0.000000e+00> : vector<8xf32>
      %38 = vector.multi_reduction <add>, %37, %cst_23 [1] : vector<8x1024xf32> to vector<8xf32>
      %39 = vector.shape_cast %38 : vector<8xf32> to vector<8x1xf32>
      %c0_24 = arith.constant 0 : index
      %c0_25 = arith.constant 0 : index
      %40 = vector.load %arg10[%c0_24, %c0_25] : memref<8x1xf32, #tpu.memory_space<vmem>>, vector<8x1xf32>
      %41 = arith.addf %39, %40 : vector<8x1xf32>
      %cst_26 = arith.constant 0.000000e+00 : f32
      %42 = vector.broadcast %cst_26 : f32 to vector<8x1xf32>
      %43 = arith.maximumf %41, %42 : vector<8x1xf32>
      %cst_27 = arith.constant 1.000000e+00 : f32
      %44 = vector.broadcast %cst_27 : f32 to vector<8x1xf32>
      %45 = arith.cmpf ole, %43, %44 : vector<8x1xf32>
      %46 = arith.truncf %3 : vector<8x1024xf32> to vector<8x1024xbf16>
      %c0_28 = arith.constant 0 : index
      %c0_29 = arith.constant 0 : index
      %47 = vector.load %arg6[%c0_28, %c0_29] : memref<1024x128xbf16, #tpu.memory_space<vmem>>, vector<1024x128xbf16>
      %cst_30 = arith.constant dense<0.000000e+00> : vector<8x128xf32>
      %48 = tpu.matmul %46, %47, %cst_30 {dimension_numbers = #tpu.dot_dimension_numbers<[1], [0], [0], [1], [0, 0, 1, 1], [], []>} : vector<8x1024xbf16>, vector<1024x128xbf16>, vector<8x128xf32> -> vector<8x128xf32>
      %c0_31 = arith.constant 0 : index
      %c0_32 = arith.constant 0 : index
      %49 = vector.load %arg7[%c0_31, %c0_32] : memref<1x128xf32, #tpu.memory_space<vmem>>, vector<1x128xf32>
      %50 = vector.broadcast %49 : vector<1x128xf32> to vector<8x128xf32>
      %51 = arith.addf %48, %50 : vector<8x128xf32>
      %c0_33 = arith.constant 0 : index
      %c0_34 = arith.constant 0 : index
      %52 = vector.load %arg11[%c0_33, %c0_34] : memref<8x128xf32, #tpu.memory_space<vmem>>, vector<8x128xf32>
      %53 = vector.shape_cast %45 : vector<8x1xi1> to vector<8x1xi1>
      %54 = vector.broadcast %53 : vector<8x1xi1> to vector<8x128xi1>
      %55 = arith.select %54, %52, %51 : vector<8x128xi1>, vector<8x128xf32>
      %cst_35 = arith.constant dense<0xFF800000> : vector<8xf32>
      %56 = vector.multi_reduction <maximumf>, %55, %cst_35 [1] : vector<8x128xf32> to vector<8xf32>
      %57 = vector.shape_cast %56 : vector<8xf32> to vector<8x1xf32>
      %58 = vector.broadcast %57 : vector<8x1xf32> to vector<8x128xf32>
      %59 = arith.subf %55, %58 : vector<8x128xf32>
      %60 = math.exp %59 : vector<8x128xf32>
      %cst_36 = arith.constant dense<0.000000e+00> : vector<8xf32>
      %61 = vector.multi_reduction <add>, %60, %cst_36 [1] : vector<8x128xf32> to vector<8xf32>
      %62 = vector.shape_cast %61 : vector<8xf32> to vector<8x1xf32>
      %63 = tpu.reciprocal %62 {approx = true} : vector<8x1xf32> -> vector<8x1xf32>
      %64 = vector.broadcast %63 : vector<8x1xf32> to vector<8x128xf32>
      %65 = arith.mulf %60, %64 : vector<8x128xf32>
      %c0_37 = arith.constant 0 : index
      %c0_38 = arith.constant 0 : index
      %66 = vector.load %arg8[%c0_37, %c0_38] : memref<8x128xf32, #tpu.memory_space<vmem>>, vector<8x128xf32>
      tpu.vector_store %arg8[%c0_37, %c0_38], %65 {strides = array<i32>} : memref<8x128xf32, #tpu.memory_space<vmem>>, vector<8x128xf32>,
      %67 = vector.shape_cast %45 : vector<8x1xi1> to vector<8x1xi1>
      %68 = vector.broadcast %67 : vector<8x1xi1> to vector<8x128xi1>
      %69 = arith.extui %68 : vector<8x128xi1> to vector<8x128xi8>
      %c0_39 = arith.constant 0 : index
      %c0_40 = arith.constant 0 : index
      %70 = vector.load %arg9[%c0_39, %c0_40] : memref<8x128xi8, #tpu.memory_space<vmem>>, vector<8x128xi8>
      tpu.vector_store %arg9[%c0_39, %c0_40], %69 {strides = array<i32>} : memref<8x128xi8, #tpu.memory_space<vmem>>, vector<8x128xi8>,
    } else {
    }
    return
  }
  func.func @transform_0(%arg0: i32, %arg1: i32) -> (i32, i32) {
    %c0_i32 = arith.constant 0 : i32
    %c0_i32_0 = arith.constant 0 : i32
    return %arg0, %c0_i32 : i32, i32
  }
  func.func @transform_1(%arg0: i32, %arg1: i32) -> (i32, i32) {
    %c0_i32 = arith.constant 0 : i32
    %c0_i32_0 = arith.constant 0 : i32
    return %c0_i32, %arg1 : i32, i32
  }
  func.func @transform_2(%arg0: i32, %arg1: i32) -> (i32, i32) {
    %c0_i32 = arith.constant 0 : i32
    %c0_i32_0 = arith.constant 0 : i32
    return %c0_i32, %arg1 : i32, i32
  }
  func.func @transform_3(%arg0: i32, %arg1: i32) -> (i32, i32) {
    %c0_i32 = arith.constant 0 : i32
    %c0_i32_0 = arith.constant 0 : i32
    return %arg1, %c0_i32 : i32, i32
  }
  func.func @transform_4(%arg0: i32, %arg1: i32) -> (i32, i32) {
    %c0_i32 = arith.constant 0 : i32
    %c0_i32_0 = arith.constant 0 : i32
    %c0_i32_1 = arith.constant 0 : i32
    return %c0_i32, %c0_i32_0 : i32, i32
  }
  func.func @transform_5(%arg0: i32, %arg1: i32) -> (i32, i32) {
    %c0_i32 = arith.constant 0 : i32
    %c0_i32_0 = arith.constant 0 : i32
    %c0_i32_1 = arith.constant 0 : i32
    return %c0_i32, %c0_i32_0 : i32, i32
  }
  func.func @transform_6(%arg0: i32, %arg1: i32) -> (i32, i32) {
    %c0_i32 = arith.constant 0 : i32
    %c0_i32_0 = arith.constant 0 : i32
    return %arg0, %c0_i32 : i32, i32
  }
  func.func @transform_7(%arg0: i32, %arg1: i32) -> (i32, i32) {
    %c0_i32 = arith.constant 0 : i32
    %c0_i32_0 = arith.constant 0 : i32
    return %arg0, %c0_i32 : i32, i32
  }
}

</mosaic_0001>

<llo_original>
// kernel: tpu_custom_call.1
$region0: #{tpu_custom_call.1}
  #allocation0 [shape = 'u32[]', space=smem, size = 0x4, offset = 0x4, fixed_abs, tag = 'smem constant byte address 0x4 - core index']
  #allocation1 [shape = 'u32[144,128]{1,0:T(1,128)}', space=vmem, size = 0x12000, scoped, tag = 'internal scratch']
  #allocation2 [shape = 'f32[8,1]{1,0:T(8,128)}', space=vmem, size = 0x1000, scoped, tag = 'scratch operand']
  #allocation3 [shape = 'f32[8,128]{1,0:T(8,128)}', space=vmem, size = 0x1000, scoped, tag = 'scratch operand']
  %s0 = inlined_call_operand.hbm [shape: f32[8,1024], index: 0, kind: input, shape index: {}]
  %s1 = inlined_call_operand.hbm [shape: f32[1024,128], index: 1, kind: input, shape index: {}]
  %s2 = inlined_call_operand.vmem [shape: f32[1,128], index: 2, kind: input, shape index: {}]
  %s3 = inlined_call_operand.hbm [shape: f32[128,128], index: 3, kind: input, shape index: {}]
  %s4 = inlined_call_operand.hbm [shape: bf16[1024,128], index: 4, kind: input, shape index: {}]
  %s5 = inlined_call_operand.vmem [shape: f32[1,128], index: 5, kind: input, shape index: {}]
  %s6 = inlined_call_operand.hbm [shape: f32[8,128], index: 6, kind: output, shape index: {0}]
  %s7 = inlined_call_operand.hbm [shape: s8[8,128], index: 7, kind: output, shape index: {1}]
  %8 = xla_tuple %s6, %s7
  %s9 = sld [smem:[#allocation0]]
  $region66: #{tpu_custom_call.1} parent=0
    _
  %s11 = ssub.s32 1, %s9
  %s12 = scalar_select 0, %s11, %s9
  $region1: #{tpu_custom_call.1} parent=0
    #allocation4 [shape = 'u8[32768]{0}', space=vmem, size = 0x8000, scoped, tag = 'input window, operand 0, single buffered']
    #allocation5 [shape = 's32[1]{0}', space=sflag, size = 0x4, scoped, tag = 'scoped memory for tpu_custom_call.1']
    #allocation6 [shape = 's32[1]{0}', space=sflag, size = 0x4, scoped, tag = 'scoped memory for tpu_custom_call.1']
    #allocation7 [shape = 'u8[524288]{0}', space=vmem, size = 0x80000, scoped, tag = 'input window, operand 1, single buffered']
    #allocation8 [shape = 's32[1]{0}', space=sflag, size = 0x4, scoped, tag = 'scoped memory for tpu_custom_call.1']
    #allocation9 [shape = 'u8[65536]{0}', space=vmem, size = 0x10000, scoped, tag = 'input window, operand 3, single buffered']
    #allocation10 [shape = 'u8[262144]{0}', space=vmem, size = 0x40000, scoped, tag = 'input window, operand 4, single buffered']
    #allocation11 [shape = 's32[1]{0}', space=sflag, size = 0x4, scoped, tag = 'scoped memory for tpu_custom_call.1']
    #allocation12 [shape = 'u8[4096]{0}', space=vmem, size = 0x1000, scoped, tag = 'output window, operand 0, single buffered']
    #allocation13 [shape = 'u8[1024]{0}', space=vmem, size = 0x400, scoped, tag = 'output window, operand 1, single buffered']
    #allocation14 [shape = 's32[1]{0}', space=sflag, size = 0x4, scoped, tag = 'scoped memory for tpu_custom_call.1']
    %13 = vsyncpa [#allocation5], 0
    %14 = vsyncpa [#allocation8], 0
    %15 = vsyncpa [#allocation11], 0
    %16 = vsyncpa [#allocation6], 0
    %17 = vsyncpa [#allocation14], 0
    // Predicated region
    $region2: #{tpu_custom_call.1} parent=1 // pred_check
      _
    $region3: #{tpu_custom_call.1} parent=1 // pred_check_branch
      %19 = sbr.rel (0) target = $region5
    $region4: #{tpu_custom_call.1} parent=1 // pred_region
      %s21 = ssub.s32 1024, 1024
      %22 = vsyncadd [#allocation5], %s21
      %s24 = sshll.u32 [#allocation4], 4
      %s25 = int_to_ptr.vmem [resolvable:$true] %s24
      %27 = dma.hbm_to_vmem [thread:$0]  %s0, 1024, %s25, [#allocation5]
    $region5: #{tpu_custom_call.1} parent=1 // pred_fallthru
      _
    // Predicated region
    $region6: #{tpu_custom_call.1} parent=1 // pred_check
      _
    $region7: #{tpu_custom_call.1} parent=1 // pred_check_branch
      %29 = sbr.rel (0) target = $region9
    $region8: #{tpu_custom_call.1} parent=1 // pred_region
      %s31 = ssub.s32 16384, 16384
      %32 = vsyncadd [#allocation8], %s31
      %s33 = sshll.u32 [#allocation7], 4
      %s34 = int_to_ptr.vmem [resolvable:$true] %s33
      %39 = dma.hbm_to_vmem [thread:$0]  %s1, 16384, %s34, [#allocation8], 128, 128, 8
    $region9: #{tpu_custom_call.1} parent=1 // pred_fallthru
      _
    // Predicated region
    $region10: #{tpu_custom_call.1} parent=1 // pred_check
      _
    $region11: #{tpu_custom_call.1} parent=1 // pred_check_branch
      %41 = sbr.rel (0) target = $region13
    $region12: #{tpu_custom_call.1} parent=1 // pred_region
      _
    $region13: #{tpu_custom_call.1} parent=1 // pred_fallthru
      _
    // Predicated region
    $region14: #{tpu_custom_call.1} parent=1 // pred_check
      _
    $region15: #{tpu_custom_call.1} parent=1 // pred_check_branch
      %43 = sbr.rel (0) target = $region17
    $region16: #{tpu_custom_call.1} parent=1 // pred_region
      %s45 = ssub.s32 2048, 2048
      %46 = vsyncadd [#allocation8], %s45
      %s47 = sshll.u32 [#allocation9], 4
      %s48 = int_to_ptr.vmem [resolvable:$true] %s47
      %53 = dma.hbm_to_vmem [thread:$0]  %s3, 2048, %s48, [#allocation8], 128, 128, 8
    $region17: #{tpu_custom_call.1} parent=1 // pred_fallthru
      _
    // Predicated region
    $region18: #{tpu_custom_call.1} parent=1 // pred_check
      _
    $region19: #{tpu_custom_call.1} parent=1 // pred_check_branch
      %55 = sbr.rel (0) target = $region21
    $region20: #{tpu_custom_call.1} parent=1 // pred_region
      %s57 = ssub.s32 8192, 8192
      %58 = vsyncadd [#allocation11], %s57
      %s59 = sshll.u32 [#allocation10], 4
      %s60 = int_to_ptr.vmem [resolvable:$true] %s59
      %65 = dma.hbm_to_vmem [thread:$0]  %s4, 8192, %s60, [#allocation11], 64, 64, 4
    $region21: #{tpu_custom_call.1} parent=1 // pred_fallthru
      _
    // Predicated region
    $region22: #{tpu_custom_call.1} parent=1 // pred_check
      _
    $region23: #{tpu_custom_call.1} parent=1 // pred_check_branch
      %67 = sbr.rel (0) target = $region25
    $region24: #{tpu_custom_call.1} parent=1 // pred_region
      _
    $region25: #{tpu_custom_call.1} parent=1 // pred_fallthru
      _
    // Predicated region
    $region26: #{tpu_custom_call.1} parent=1 // pred_check
      _
    $region27: #{tpu_custom_call.1} parent=1 // pred_check_branch
      %69 = sbr.rel (0) target = $region29
    $region28: #{tpu_custom_call.1} parent=1 // pred_region
      %70 = dma.done [#allocation5], 1024
    $region29: #{tpu_custom_call.1} parent=1 // pred_fallthru
      _
    // Predicated region
    $region30: #{tpu_custom_call.1} parent=1 // pred_check
      _
    $region31: #{tpu_custom_call.1} parent=1 // pred_check_branch
      %72 = sbr.rel (0) target = $region33
    $region32: #{tpu_custom_call.1} parent=1 // pred_region
      %73 = dma.done [#allocation8], 16384
    $region33: #{tpu_custom_call.1} parent=1 // pred_fallthru
      _
    // Predicated region
    $region34: #{tpu_custom_call.1} parent=1 // pred_check
      _
    $region35: #{tpu_custom_call.1} parent=1 // pred_check_branch
      %75 = sbr.rel (0) target = $region37
    $region36: #{tpu_custom_call.1} parent=1 // pred_region
      %76 = dma.done [#allocation8], 2048
    $region37: #{tpu_custom_call.1} parent=1 // pred_fallthru
      _
    // Predicated region
    $region38: #{tpu_custom_call.1} parent=1 // pred_check
      _
    $region39: #{tpu_custom_call.1} parent=1 // pred_check_branch
      %78 = sbr.rel (0) target = $region41
    $region40: #{tpu_custom_call.1} parent=1 // pred_region
      %79 = dma.done [#allocation11], 8192
    $region41: #{tpu_custom_call.1} parent=1 // pred_fallthru
      _
    %p83 = scmp.eq.s32.totalorder 0, 0
    // Predicated region
    $region42: #{tpu_custom_call.1} parent=1 // pred_check
      %p84 = pneg %p83
    $region43: #{tpu_custom_call.1} parent=1 // pred_check_branch
      %86 = sbr.rel (%p84) target = $region45
    $region44: #{tpu_custom_call.1} parent=1 // pred_region
      %vm87 = vcmask 7168
      %88 = vst.msk [vmem:[#allocation2] sm:$0xff] %vm87, 1e+30
      %89 = vst [vmem:[#allocation3] sm:$0xff] 0.0
    $region45: #{tpu_custom_call.1} parent=1 // pred_fallthru
      _
    %v90 = vld [vmem:[#allocation4] sm:$0xff]
    %v91 = vld [vmem:[#allocation4 + $0x8] sm:$0xff]
    %v92 = vld [vmem:[#allocation4 + $0x10] sm:$0xff]
    %v93 = vld [vmem:[#allocation4 + $0x18] sm:$0xff]
    %v94 = vld [vmem:[#allocation4 + $0x20] sm:$0xff]
    %v95 = vld [vmem:[#allocation4 + $0x28] sm:$0xff]
    %v96 = vld [vmem:[#allocation4 + $0x30] sm:$0xff]
    %v97 = vld [vmem:[#allocation4 + $0x38] sm:$0xff]
    %v98 = vld [vmem:[#allocation7] sm:$0xff]
    %v99 = vld [vmem:[#allocation7 + $0x8] sm:$0xff]
    %v100 = vld [vmem:[#allocation7 + $0x10] sm:$0xff]
    %v101 = vld [vmem:[#allocation7 + $0x18] sm:$0xff]
    %v102 = vld [vmem:[#allocation7 + $0x20] sm:$0xff]
    %v103 = vld [vmem:[#allocation7 + $0x28] sm:$0xff]
    %v104 = vld [vmem:[#allocation7 + $0x30] sm:$0xff]
    %v105 = vld [vmem:[#allocation7 + $0x38] sm:$0xff]
    %v106 = vld [vmem:[#allocation7 + $0x40] sm:$0xff]
    %v107 = vld [vmem:[#allocation7 + $0x48] sm:$0xff]
    %v108 = vld [vmem:[#allocation7 + $0x50] sm:$0xff]
    %v109 = vld [vmem:[#allocation7 + $0x58] sm:$0xff]
    %v110 = vld [vmem:[#allocation7 + $0x60] sm:$0xff]
    %v111 = vld [vmem:[#allocation7 + $0x68] sm:$0xff]
    %v112 = vld [vmem:[#allocation7 + $0x70] sm:$0xff]
    %v113 = vld [vmem:[#allocation7 + $0x78] sm:$0xff]
    %v114 = vld [vmem:[#allocation7 + $0x80] sm:$0xff]
    %v115 = vld [vmem:[#allocation7 + $0x88] sm:$0xff]
    %v116 = vld [vmem:[#allocation7 + $0x90] sm:$0xff]
    %v117 = vld [vmem:[#allocation7 + $0x98] sm:$0xff]
    %v118 = vld [vmem:[#allocation7 + $0xa0] sm:$0xff]
    %v119 = vld [vmem:[#allocation7 + $0xa8] sm:$0xff]
    %v120 = vld [vmem:[#allocation7 + $0xb0] sm:$0xff]
    %v121 = vld [vmem:[#allocation7 + $0xb8] sm:$0xff]
    %v122 = vld [vmem:[#allocation7 + $0xc0] sm:$0xff]
    %v123 = vld [vmem:[#allocation7 + $0xc8] sm:$0xff]
    %v124 = vld [vmem:[#allocation7 + $0xd0] sm:$0xff]
    %v125 = vld [vmem:[#allocation7 + $0xd8] sm:$0xff]
    %v126 = vld [vmem:[#allocation7 + $0xe0] sm:$0xff]
    %v127 = vld [vmem:[#allocation7 + $0xe8] sm:$0xff]
    %v128 = vld [vmem:[#allocation7 + $0xf0] sm:$0xff]
    %v129 = vld [vmem:[#allocation7 + $0xf8] sm:$0xff]
    %v130 = vld [vmem:[#allocation7 + $0x100] sm:$0xff]
    %v131 = vld [vmem:[#allocation7 + $0x108] sm:$0xff]
    %v132 = vld [vmem:[#allocation7 + $0x110] sm:$0xff]
    %v133 = vld [vmem:[#allocation7 + $0x118] sm:$0xff]
    %v134 = vld [vmem:[#allocation7 + $0x120] sm:$0xff]
    %v135 = vld [vmem:[#allocation7 + $0x128] sm:$0xff]
    %v136 = vld [vmem:[#allocation7 + $0x130] sm:$0xff]
    %v137 = vld [vmem:[#allocation7 + $0x138] sm:$0xff]
    %v138 = vld [vmem:[#allocation7 + $0x140] sm:$0xff]
    %v139 = vld [vmem:[#allocation7 + $0x148] sm:$0xff]
    %v140 = vld [vmem:[#allocation7 + $0x150] sm:$0xff]
    %v141 = vld [vmem:[#allocation7 + $0x158] sm:$0xff]
    %v142 = vld [vmem:[#allocation7 + $0x160] sm:$0xff]
    %v143 = vld [vmem:[#allocation7 + $0x168] sm:$0xff]
    %v144 = vld [vmem:[#allocation7 + $0x170] sm:$0xff]
    %v145 = vld [vmem:[#allocation7 + $0x178] sm:$0xff]
    %v146 = vld [vmem:[#allocation7 + $0x180] sm:$0xff]
    %v147 = vld [vmem:[#allocation7 + $0x188] sm:$0xff]
    %v148 = vld [vmem:[#allocation7 + $0x190] sm:$0xff]
    %v149 = vld [vmem:[#allocation7 + $0x198] sm:$0xff]
    %v150 = vld [vmem:[#allocation7 + $0x1a0] sm:$0xff]
    %v151 = vld [vmem:[#allocation7 + $0x1a8] sm:$0xff]
    %v152 = vld [vmem:[#allocation7 + $0x1b0] sm:$0xff]
    %v153 = vld [vmem:[#allocation7 + $0x1b8] sm:$0xff]
    %v154 = vld [vmem:[#allocation7 + $0x1c0] sm:$0xff]
    %v155 = vld [vmem:[#allocation7 + $0x1c8] sm:$0xff]
    %v156 = vld [vmem:[#allocation7 + $0x1d0] sm:$0xff]
    %v157 = vld [vmem:[#allocation7 + $0x1d8] sm:$0xff]
    %v158 = vld [vmem:[#allocation7 + $0x1e0] sm:$0xff]
    %v159 = vld [vmem:[#allocation7 + $0x1e8] sm:$0xff]
    %v160 = vld [vmem:[#allocation7 + $0x1f0] sm:$0xff]
    %v161 = vld [vmem:[#allocation7 + $0x1f8] sm:$0xff]
    %v162 = vld [vmem:[#allocation7 + $0x200] sm:$0xff]
    %v163 = vld [vmem:[#allocation7 + $0x208] sm:$0xff]
    %v164 = vld [vmem:[#allocation7 + $0x210] sm:$0xff]
    %v165 = vld [vmem:[#allocation7 + $0x218] sm:$0xff]
    %v166 = vld [vmem:[#allocation7 + $0x220] sm:$0xff]
    %v167 = vld [vmem:[#allocation7 + $0x228] sm:$0xff]
    %v168 = vld [vmem:[#allocation7 + $0x230] sm:$0xff]
    %v169 = vld [vmem:[#allocation7 + $0x238] sm:$0xff]
    %v170 = vld [vmem:[#allocation7 + $0x240] sm:$0xff]
    %v171 = vld [vmem:[#allocation7 + $0x248] sm:$0xff]
    %v172 = vld [vmem:[#allocation7 + $0x250] sm:$0xff]
    %v173 = vld [vmem:[#allocation7 + $0x258] sm:$0xff]
    %v174 = vld [vmem:[#allocation7 + $0x260] sm:$0xff]
    %v175 = vld [vmem:[#allocation7 + $0x268] sm:$0xff]
    %v176 = vld [vmem:[#allocation7 + $0x270] sm:$0xff]
    %v177 = vld [vmem:[#allocation7 + $0x278] sm:$0xff]
    %v178 = vld [vmem:[#allocation7 + $0x280] sm:$0xff]
    %v179 = vld [vmem:[#allocation7 + $0x288] sm:$0xff]
    %v180 = vld [vmem:[#allocation7 + $0x290] sm:$0xff]
    %v181 = vld [vmem:[#allocation7 + $0x298] sm:$0xff]
    %v182 = vld [vmem:[#allocation7 + $0x2a0] sm:$0xff]
    %v183 = vld [vmem:[#allocation7 + $0x2a8] sm:$0xff]
    %v184 = vld [vmem:[#allocation7 + $0x2b0] sm:$0xff]
    %v185 = vld [vmem:[#allocation7 + $0x2b8] sm:$0xff]
    %v186 = vld [vmem:[#allocation7 + $0x2c0] sm:$0xff]
    %v187 = vld [vmem:[#allocation7 + $0x2c8] sm:$0xff]
    %v188 = vld [vmem:[#allocation7 + $0x2d0] sm:$0xff]
    %v189 = vld [vmem:[#allocation7 + $0x2d8] sm:$0xff]
    %v190 = vld [vmem:[#allocation7 + $0x2e0] sm:$0xff]
    %v191 = vld [vmem:[#allocation7 + $0x2e8] sm:$0xff]
    %v192 = vld [vmem:[#allocation7 + $0x2f0] sm:$0xff]
    %v193 = vld [vmem:[#allocation7 + $0x2f8] sm:$0xff]
    %v194 = vld [vmem:[#allocation7 + $0x300] sm:$0xff]
    %v195 = vld [vmem:[#allocation7 + $0x308] sm:$0xff]
    %v196 = vld [vmem:[#allocation7 + $0x310] sm:$0xff]
    %v197 = vld [vmem:[#allocation7 + $0x318] sm:$0xff]
    %v198 = vld [vmem:[#allocation7 + $0x320] sm:$0xff]
    %v199 = vld [vmem:[#allocation7 + $0x328] sm:$0xff]
    %v200 = vld [vmem:[#allocation7 + $0x330] sm:$0xff]
    %v201 = vld [vmem:[#allocation7 + $0x338] sm:$0xff]
    %v202 = vld [vmem:[#allocation7 + $0x340] sm:$0xff]
    %v203 = vld [vmem:[#allocation7 + $0x348] sm:$0xff]
    %v204 = vld [vmem:[#allocation7 + $0x350] sm:$0xff]
    %v205 = vld [vmem:[#allocation7 + $0x358] sm:$0xff]
    %v206 = vld [vmem:[#allocation7 + $0x360] sm:$0xff]
    %v207 = vld [vmem:[#allocation7 + $0x368] sm:$0xff]
    %v208 = vld [vmem:[#allocation7 + $0x370] sm:$0xff]
    %v209 = vld [vmem:[#allocation7 + $0x378] sm:$0xff]
    %v210 = vld [vmem:[#allocation7 + $0x380] sm:$0xff]
    %v211 = vld [vmem:[#allocation7 + $0x388] sm:$0xff]
    %v212 = vld [vmem:[#allocation7 + $0x390] sm:$0xff]
    %v213 = vld [vmem:[#allocation7 + $0x398] sm:$0xff]
    %v214 = vld [vmem:[#allocation7 + $0x3a0] sm:$0xff]
    %v215 = vld [vmem:[#allocation7 + $0x3a8] sm:$0xff]
    %v216 = vld [vmem:[#allocation7 + $0x3b0] sm:$0xff]
    %v217 = vld [vmem:[#allocation7 + $0x3b8] sm:$0xff]
    %v218 = vld [vmem:[#allocation7 + $0x3c0] sm:$0xff]
    %v219 = vld [vmem:[#allocation7 + $0x3c8] sm:$0xff]
    %v220 = vld [vmem:[#allocation7 + $0x3d0] sm:$0xff]
    %v221 = vld [vmem:[#allocation7 + $0x3d8] sm:$0xff]
    %v222 = vld [vmem:[#allocation7 + $0x3e0] sm:$0xff]
    %v223 = vld [vmem:[#allocation7 + $0x3e8] sm:$0xff]
    %v224 = vld [vmem:[#allocation7 + $0x3f0] sm:$0xff]
    %v225 = vld [vmem:[#allocation7 + $0x3f8] sm:$0xff]
    %v226 = vld [vmem:[%s2] sm:$0x1]
    %v228 = vlaneseq
    %v229 = vshrl.u32 %v228, 7
    %v230 = vsub.s32 0, %v229
    %v231 = vrot.slane %v226, %v230
    %233 = vmatprep.subr.mxu0 0.0
    %234 = vmatpush1.msra.mxu0 %v113
    %235 = vmatprep.subr.mxu0 0.0
    %236 = vmatpush1.msra.mxu0 %v112
    %237 = vmatprep.subr.mxu0 0.0
    %238 = vmatpush1.msra.mxu0 %v111
    %239 = vmatprep.subr.mxu0 0.0
    %240 = vmatpush1.msra.mxu0 %v110
    %241 = vmatprep.subr.mxu0 0.0
    %242 = vmatpush1.msra.mxu0 %v109
    %243 = vmatprep.subr.mxu0 0.0
    %244 = vmatpush1.msra.mxu0 %v108
    %245 = vmatprep.subr.mxu0 0.0
    %246 = vmatpush1.msra.mxu0 %v107
    %247 = vmatprep.subr.mxu0 0.0
    %248 = vmatpush1.msra.mxu0 %v106
    %249 = vmatprep.subr.mxu0 0.0
    %250 = vmatpush1.msra.mxu0 %v105
    %251 = vmatprep.subr.mxu0 0.0
    %252 = vmatpush1.msra.mxu0 %v104
    %253 = vmatprep.subr.mxu0 0.0
    %254 = vmatpush1.msra.mxu0 %v103
    %255 = vmatprep.subr.mxu0 0.0
    %256 = vmatpush1.msra.mxu0 %v102
    %257 = vmatprep.subr.mxu0 0.0
    %258 = vmatpush1.msra.mxu0 %v101
    %259 = vmatprep.subr.mxu0 0.0
    %260 = vmatpush1.msra.mxu0 %v100
    %261 = vmatprep.subr.mxu0 0.0
    %262 = vmatpush1.msra.mxu0 %v99
    %263 = vmatprep.subr.mxu0 0.0
    %264 = vmatpush1.msra.mxu0 %v98
    %265 = vmatprep.subr.mxu0 0.0
    %266 = vmatpush2.msra.mxu0 %v129
    %267 = vmatprep.subr.mxu0 0.0
    %268 = vmatpush2.msra.mxu0 %v128
    %269 = vmatprep.subr.mxu0 0.0
    %270 = vmatpush2.msra.mxu0 %v127
    %271 = vmatprep.subr.mxu0 0.0
    %272 = vmatpush2.msra.mxu0 %v126
    %273 = vmatprep.subr.mxu0 0.0
    %274 = vmatpush2.msra.mxu0 %v125
    %275 = vmatprep.subr.mxu0 0.0
    %276 = vmatpush2.msra.mxu0 %v124
    %277 = vmatprep.subr.mxu0 0.0
    %278 = vmatpush2.msra.mxu0 %v123
    %279 = vmatprep.subr.mxu0 0.0
    %280 = vmatpush2.msra.mxu0 %v122
    %281 = vmatprep.subr.mxu0 0.0
    %282 = vmatpush2.msra.mxu0 %v121
    %283 = vmatprep.subr.mxu0 0.0
    %284 = vmatpush2.msra.mxu0 %v120
    %285 = vmatprep.subr.mxu0 0.0
    %286 = vmatpush2.msra.mxu0 %v119
    %287 = vmatprep.subr.mxu0 0.0
    %288 = vmatpush2.msra.mxu0 %v118
    %289 = vmatprep.subr.mxu0 0.0
    %290 = vmatpush2.msra.mxu0 %v117
    %291 = vmatprep.subr.mxu0 0.0
    %292 = vmatpush2.msra.mxu0 %v116
    %293 = vmatprep.subr.mxu0 0.0
    %294 = vmatpush2.msra.mxu0 %v115
    %295 = vmatprep.subr.mxu0 0.0
    %296 = vmatpush2.msra.mxu0 %v114
    %297 = vmatprep.mubr.f32.mxu0 %v91
    %298 = vmatmul.mubr.f32.gmra.mxu0 %v90
    %v299 = vpop.f32.mrf.mxu0
    %v300 = vadd.f32 %v231, %v299
    %v301 = vpop.f32.mrf.mxu0
    %302 = vdwg.mxu0
    %303 = vmatprep.subr.mxu0 0.0
    %304 = vmatpush1.msra.mxu0 %v145
    %305 = vmatprep.subr.mxu0 0.0
    %306 = vmatpush1.msra.mxu0 %v144
    %307 = vmatprep.subr.mxu0 0.0
    %308 = vmatpush1.msra.mxu0 %v143
    %309 = vmatprep.subr.mxu0 0.0
    %310 = vmatpush1.msra.mxu0 %v142
    %311 = vmatprep.subr.mxu0 0.0
    %312 = vmatpush1.msra.mxu0 %v141
    %313 = vmatprep.subr.mxu0 0.0
    %314 = vmatpush1.msra.mxu0 %v140
    %315 = vmatprep.subr.mxu0 0.0
    %316 = vmatpush1.msra.mxu0 %v139
    %317 = vmatprep.subr.mxu0 0.0
    %318 = vmatpush1.msra.mxu0 %v138
    %319 = vmatprep.subr.mxu0 0.0
    %320 = vmatpush1.msra.mxu0 %v137
    %321 = vmatprep.subr.mxu0 0.0
    %322 = vmatpush1.msra.mxu0 %v136
    %323 = vmatprep.subr.mxu0 0.0
    %324 = vmatpush1.msra.mxu0 %v135
    %325 = vmatprep.subr.mxu0 0.0
    %326 = vmatpush1.msra.mxu0 %v134
    %327 = vmatprep.subr.mxu0 0.0
    %328 = vmatpush1.msra.mxu0 %v133
    %329 = vmatprep.subr.mxu0 0.0
    %330 = vmatpush1.msra.mxu0 %v132
    %331 = vmatprep.subr.mxu0 0.0
    %332 = vmatpush1.msra.mxu0 %v131
    %333 = vmatprep.subr.mxu0 0.0
    %334 = vmatpush1.msra.mxu0 %v130
    %335 = vmatprep.subr.mxu0 0.0
    %336 = vmatpush2.msra.mxu0 %v161
    %337 = vmatprep.subr.mxu0 0.0
    %338 = vmatpush2.msra.mxu0 %v160
    %339 = vmatprep.subr.mxu0 0.0
    %340 = vmatpush2.msra.mxu0 %v159
    %341 = vmatprep.subr.mxu0 0.0
    %342 = vmatpush2.msra.mxu0 %v158
    %343 = vmatprep.subr.mxu0 0.0
    %344 = vmatpush2.msra.mxu0 %v157
    %345 = vmatprep.subr.mxu0 0.0
    %346 = vmatpush2.msra.mxu0 %v156
    %347 = vmatprep.subr.mxu0 0.0
    %348 = vmatpush2.msra.mxu0 %v155
    %349 = vmatprep.subr.mxu0 0.0
    %350 = vmatpush2.msra.mxu0 %v154
    %351 = vmatprep.subr.mxu0 0.0
    %352 = vmatpush2.msra.mxu0 %v153
    %353 = vmatprep.subr.mxu0 0.0
    %354 = vmatpush2.msra.mxu0 %v152
    %355 = vmatprep.subr.mxu0 0.0
    %356 = vmatpush2.msra.mxu0 %v151
    %357 = vmatprep.subr.mxu0 0.0
    %358 = vmatpush2.msra.mxu0 %v150
    %359 = vmatprep.subr.mxu0 0.0
    %360 = vmatpush2.msra.mxu0 %v149
    %361 = vmatprep.subr.mxu0 0.0
    %362 = vmatpush2.msra.mxu0 %v148
    %363 = vmatprep.subr.mxu0 0.0
    %364 = vmatpush2.msra.mxu0 %v147
    %365 = vmatprep.subr.mxu0 0.0
    %366 = vmatpush2.msra.mxu0 %v146
    %367 = vmatprep.mubr.f32.mxu0 %v93
    %368 = vmatmul.mubr.f32.gmra.mxu0 %v92
    %v369 = vpop.f32.mrf.mxu0
    %v370 = vadd.f32 %v300, %v369
    %v371 = vpop.f32.mrf.mxu0
    %372 = vdwg.mxu0
    %373 = vmatprep.subr.mxu0 0.0
    %374 = vmatpush1.msra.mxu0 %v177
    %375 = vmatprep.subr.mxu0 0.0
    %376 = vmatpush1.msra.mxu0 %v176
    %377 = vmatprep.subr.mxu0 0.0
    %378 = vmatpush1.msra.mxu0 %v175
    %379 = vmatprep.subr.mxu0 0.0
    %380 = vmatpush1.msra.mxu0 %v174
    %381 = vmatprep.subr.mxu0 0.0
    %382 = vmatpush1.msra.mxu0 %v173
    %383 = vmatprep.subr.mxu0 0.0
    %384 = vmatpush1.msra.mxu0 %v172
    %385 = vmatprep.subr.mxu0 0.0
    %386 = vmatpush1.msra.mxu0 %v171
    %387 = vmatprep.subr.mxu0 0.0
    %388 = vmatpush1.msra.mxu0 %v170
    %389 = vmatprep.subr.mxu0 0.0
    %390 = vmatpush1.msra.mxu0 %v169
    %391 = vmatprep.subr.mxu0 0.0
    %392 = vmatpush1.msra.mxu0 %v168
    %393 = vmatprep.subr.mxu0 0.0
    %394 = vmatpush1.msra.mxu0 %v167
    %395 = vmatprep.subr.mxu0 0.0
    %396 = vmatpush1.msra.mxu0 %v166
    %397 = vmatprep.subr.mxu0 0.0
    %398 = vmatpush1.msra.mxu0 %v165
    %399 = vmatprep.subr.mxu0 0.0
    %400 = vmatpush1.msra.mxu0 %v164
    %401 = vmatprep.subr.mxu0 0.0
    %402 = vmatpush1.msra.mxu0 %v163
    %403 = vmatprep.subr.mxu0 0.0
    %404 = vmatpush1.msra.mxu0 %v162
    %405 = vmatprep.subr.mxu0 0.0
    %406 = vmatpush2.msra.mxu0 %v193
    %407 = vmatprep.subr.mxu0 0.0
    %408 = vmatpush2.msra.mxu0 %v192
    %409 = vmatprep.subr.mxu0 0.0
    %410 = vmatpush2.msra.mxu0 %v191
    %411 = vmatprep.subr.mxu0 0.0
    %412 = vmatpush2.msra.mxu0 %v190
    %413 = vmatprep.subr.mxu0 0.0
    %414 = vmatpush2.msra.mxu0 %v189
    %415 = vmatprep.subr.mxu0 0.0
    %416 = vmatpush2.msra.mxu0 %v188
    %417 = vmatprep.subr.mxu0 0.0
    %418 = vmatpush2.msra.mxu0 %v187
    %419 = vmatprep.subr.mxu0 0.0
    %420 = vmatpush2.msra.mxu0 %v186
    %421 = vmatprep.subr.mxu0 0.0
    %422 = vmatpush2.msra.mxu0 %v185
    %423 = vmatprep.subr.mxu0 0.0
    %424 = vmatpush2.msra.mxu0 %v184
    %425 = vmatprep.subr.mxu0 0.0
    %426 = vmatpush2.msra.mxu0 %v183
    %427 = vmatprep.subr.mxu0 0.0
    %428 = vmatpush2.msra.mxu0 %v182
    %429 = vmatprep.subr.mxu0 0.0
    %430 = vmatpush2.msra.mxu0 %v181
    %431 = vmatprep.subr.mxu0 0.0
    %432 = vmatpush2.msra.mxu0 %v180
    %433 = vmatprep.subr.mxu0 0.0
    %434 = vmatpush2.msra.mxu0 %v179
    %435 = vmatprep.subr.mxu0 0.0
    %436 = vmatpush2.msra.mxu0 %v178
    %437 = vmatprep.mubr.f32.mxu0 %v95
    %438 = vmatmul.mubr.f32.gmra.mxu0 %v94
    %v439 = vpop.f32.mrf.mxu0
    %v440 = vadd.f32 %v370, %v439
    %v441 = vpop.f32.mrf.mxu0
    %442 = vdwg.mxu0
    %443 = vmatprep.subr.mxu0 0.0
    %444 = vmatpush1.msra.mxu0 %v209
    %445 = vmatprep.subr.mxu0 0.0
    %446 = vmatpush1.msra.mxu0 %v208
    %447 = vmatprep.subr.mxu0 0.0
    %448 = vmatpush1.msra.mxu0 %v207
    %449 = vmatprep.subr.mxu0 0.0
    %450 = vmatpush1.msra.mxu0 %v206
    %451 = vmatprep.subr.mxu0 0.0
    %452 = vmatpush1.msra.mxu0 %v205
    %453 = vmatprep.subr.mxu0 0.0
    %454 = vmatpush1.msra.mxu0 %v204
    %455 = vmatprep.subr.mxu0 0.0
    %456 = vmatpush1.msra.mxu0 %v203
    %457 = vmatprep.subr.mxu0 0.0
    %458 = vmatpush1.msra.mxu0 %v202
    %459 = vmatprep.subr.mxu0 0.0
    %460 = vmatpush1.msra.mxu0 %v201
    %461 = vmatprep.subr.mxu0 0.0
    %462 = vmatpush1.msra.mxu0 %v200
    %463 = vmatprep.subr.mxu0 0.0
    %464 = vmatpush1.msra.mxu0 %v199
    %465 = vmatprep.subr.mxu0 0.0
    %466 = vmatpush1.msra.mxu0 %v198
    %467 = vmatprep.subr.mxu0 0.0
    %468 = vmatpush1.msra.mxu0 %v197
    %469 = vmatprep.subr.mxu0 0.0
    %470 = vmatpush1.msra.mxu0 %v196
    %471 = vmatprep.subr.mxu0 0.0
    %472 = vmatpush1.msra.mxu0 %v195
    %473 = vmatprep.subr.mxu0 0.0
    %474 = vmatpush1.msra.mxu0 %v194
    %475 = vmatprep.subr.mxu0 0.0
    %476 = vmatpush2.msra.mxu0 %v225
    %477 = vmatprep.subr.mxu0 0.0
    %478 = vmatpush2.msra.mxu0 %v224
    %479 = vmatprep.subr.mxu0 0.0
    %480 = vmatpush2.msra.mxu0 %v223
    %481 = vmatprep.subr.mxu0 0.0
    %482 = vmatpush2.msra.mxu0 %v222
    %483 = vmatprep.subr.mxu0 0.0
    %484 = vmatpush2.msra.mxu0 %v221
    %485 = vmatprep.subr.mxu0 0.0
    %486 = vmatpush2.msra.mxu0 %v220
    %487 = vmatprep.subr.mxu0 0.0
    %488 = vmatpush2.msra.mxu0 %v219
    %489 = vmatprep.subr.mxu0 0.0
    %490 = vmatpush2.msra.mxu0 %v218
    %491 = vmatprep.subr.mxu0 0.0
    %492 = vmatpush2.msra.mxu0 %v217
    %493 = vmatprep.subr.mxu0 0.0
    %494 = vmatpush2.msra.mxu0 %v216
    %495 = vmatprep.subr.mxu0 0.0
    %496 = vmatpush2.msra.mxu0 %v215
    %497 = vmatprep.subr.mxu0 0.0
    %498 = vmatpush2.msra.mxu0 %v214
    %499 = vmatprep.subr.mxu0 0.0
    %500 = vmatpush2.msra.mxu0 %v213
    %501 = vmatprep.subr.mxu0 0.0
    %502 = vmatpush2.msra.mxu0 %v212
    %503 = vmatprep.subr.mxu0 0.0
    %504 = vmatpush2.msra.mxu0 %v211
    %505 = vmatprep.subr.mxu0 0.0
    %506 = vmatpush2.msra.mxu0 %v210
    %507 = vmatprep.mubr.f32.mxu0 %v97
    %508 = vmatmul.mubr.f32.gmra.mxu0 %v96
    %v509 = vpop.f32.mrf.mxu0
    %v510 = vadd.f32 %v440, %v509
    %v511 = vpop.f32.mrf.mxu0
    %512 = vdwg.mxu0
    %513 = vmin.xlane.f32.xlu0 %v510
    %v514 = vpop.xlane.xlu0 %513
    %v515 = vlaneseq
    %v516 = vand.u32 %v515, 127
    %vm517 = vcmp.le.f32.partialorder %v510, %v514
    %v518 = vsel %vm517, %v516, 128
    %v519 = vand.u32 %v518, 65535
    %v520 = vshra.s32 %v518, 16
    %v521 = vcvt.s32.f32 %v519
    %v522 = vcvt.s32.f32 %v520
    %523 = vmin.xlane.f32.xlu0 %v522
    %v524 = vpop.xlane.xlu0 %523
    %vm525 = vcmp.eq.f32.partialorder %v522, %v524
    %v526 = vsel %vm525, %v521, inf
    %527 = vmin.xlane.f32.xlu0 %v526
    %v528 = vpop.xlane.xlu0 %527
    %v529 = vcvt.f32.s32 %v528
    %v530 = vcvt.f32.s32 %v524
    %v531 = vshll.u32 %v530, 16
    %v532 = vadd.s32 %v531, %v529
    %vm533 = vcmp.eq.s32.totalorder %v516, %v532
    %v534 = vsel %vm533, 1, 0
    %v535 = vcvt.s32.f32 %v534
    %v536 = vld [vmem:[#allocation9] sm:$0xff]
    %v537 = vld [vmem:[#allocation9 + $0x8] sm:$0xff]
    %v538 = vld [vmem:[#allocation9 + $0x10] sm:$0xff]
    %v539 = vld [vmem:[#allocation9 + $0x18] sm:$0xff]
    %v540 = vld [vmem:[#allocation9 + $0x20] sm:$0xff]
    %v541 = vld [vmem:[#allocation9 + $0x28] sm:$0xff]
    %v542 = vld [vmem:[#allocation9 + $0x30] sm:$0xff]
    %v543 = vld [vmem:[#allocation9 + $0x38] sm:$0xff]
    %v544 = vld [vmem:[#allocation9 + $0x40] sm:$0xff]
    %v545 = vld [vmem:[#allocation9 + $0x48] sm:$0xff]
    %v546 = vld [vmem:[#allocation9 + $0x50] sm:$0xff]
    %v547 = vld [vmem:[#allocation9 + $0x58] sm:$0xff]
    %v548 = vld [vmem:[#allocation9 + $0x60] sm:$0xff]
    %v549 = vld [vmem:[#allocation9 + $0x68] sm:$0xff]
    %v550 = vld [vmem:[#allocation9 + $0x70] sm:$0xff]
    %v551 = vld [vmem:[#allocation9 + $0x78] sm:$0xff]
    %552 = vmatprep.subr.mxu0 0.0
    %553 = vmatpush1.msra.mxu0 %v551
    %554 = vmatprep.subr.mxu0 0.0
    %555 = vmatpush1.msra.mxu0 %v550
    %556 = vmatprep.subr.mxu0 0.0
    %557 = vmatpush1.msra.mxu0 %v549
    %558 = vmatprep.subr.mxu0 0.0
    %559 = vmatpush1.msra.mxu0 %v548
    %560 = vmatprep.subr.mxu0 0.0
    %561 = vmatpush1.msra.mxu0 %v547
    %562 = vmatprep.subr.mxu0 0.0
    %563 = vmatpush1.msra.mxu0 %v546
    %564 = vmatprep.subr.mxu0 0.0
    %565 = vmatpush1.msra.mxu0 %v545
    %566 = vmatprep.subr.mxu0 0.0
    %567 = vmatpush1.msra.mxu0 %v544
    %568 = vmatprep.subr.mxu0 0.0
    %569 = vmatpush1.msra.mxu0 %v543
    %570 = vmatprep.subr.mxu0 0.0
    %571 = vmatpush1.msra.mxu0 %v542
    %572 = vmatprep.subr.mxu0 0.0
    %573 = vmatpush1.msra.mxu0 %v541
    %574 = vmatprep.subr.mxu0 0.0
    %575 = vmatpush1.msra.mxu0 %v540
    %576 = vmatprep.subr.mxu0 0.0
    %577 = vmatpush1.msra.mxu0 %v539
    %578 = vmatprep.subr.mxu0 0.0
    %579 = vmatpush1.msra.mxu0 %v538
    %580 = vmatprep.subr.mxu0 0.0
    %581 = vmatpush1.msra.mxu0 %v537
    %582 = vmatprep.subr.mxu0 0.0
    %583 = vmatpush1.msra.mxu0 %v536
    %584 = vmatprep.subr.mxu0 0.0
    %585 = vmatpush2.msra.mxu0 0.0
    %586 = vmatprep.subr.mxu0 0.0
    %587 = vmatpush2.msra.mxu0 0.0
    %588 = vmatprep.subr.mxu0 0.0
    %589 = vmatpush2.msra.mxu0 0.0
    %590 = vmatprep.subr.mxu0 0.0
    %591 = vmatpush2.msra.mxu0 0.0
    %592 = vmatprep.subr.mxu0 0.0
    %593 = vmatpush2.msra.mxu0 0.0
    %594 = vmatprep.subr.mxu0 0.0
    %595 = vmatpush2.msra.mxu0 0.0
    %596 = vmatprep.subr.mxu0 0.0
    %597 = vmatpush2.msra.mxu0 0.0
    %598 = vmatprep.subr.mxu0 0.0
    %599 = vmatpush2.msra.mxu0 0.0
    %600 = vmatprep.subr.mxu0 0.0
    %601 = vmatpush2.msra.mxu0 0.0
    %602 = vmatprep.subr.mxu0 0.0
    %603 = vmatpush2.msra.mxu0 0.0
    %604 = vmatprep.subr.mxu0 0.0
    %605 = vmatpush2.msra.mxu0 0.0
    %606 = vmatprep.subr.mxu0 0.0
    %607 = vmatpush2.msra.mxu0 0.0
    %608 = vmatprep.subr.mxu0 0.0
    %609 = vmatpush2.msra.mxu0 0.0
    %610 = vmatprep.subr.mxu0 0.0
    %611 = vmatpush2.msra.mxu0 0.0
    %612 = vmatprep.subr.mxu0 0.0
    %613 = vmatpush2.msra.mxu0 0.0
    %614 = vmatprep.subr.mxu0 0.0
    %615 = vmatpush2.msra.mxu0 0.0
    %616 = vmatprep.mubr.f32.mxu0 0.0
    %617 = vmatmul.mubr.f32.gmra.mxu0 %v535
    %v618 = vpop.f32.mrf.mxu0
    %v619 = vadd.f32 0.0, %v618
    %v620 = vpop.f32.mrf.mxu0
    %621 = vdwg.mxu0
    %v622 = vld [vmem:[#allocation2] sm:$0xff]
    %vm623 = vcmp.lt.f32.partialorder %v514, %v622
    %v624 = vsel %vm623, %v514, %v622
    %vm625 = vcmask 7168
    %626 = vst.msk [vmem:[#allocation2] sm:$0xff] %vm625, %v624
    %v627 = vld [vmem:[#allocation3] sm:$0xff]
    %v628 = vsel %vm623, 1, 0
    %629 = vset.pattern.permute.xlu0 0
    %630 = vperm.xlu0 %629, %v628
    %v631 = vpop.permute.xlu0 %630
    %vm632 = vcmp.eq.s32.totalorder %v631, 1
    %v633 = vsel %vm632, %v619, %v627
    %634 = vst [vmem:[#allocation3] sm:$0xff] %v633
    // Predicated region
    $region46: #{tpu_custom_call.1} parent=1 // pred_check
      %p635 = pneg %p83
    $region47: #{tpu_custom_call.1} parent=1 // pred_check_branch
      %637 = sbr.rel (%p635) target = $region49
    $region48: #{tpu_custom_call.1} parent=1 // pred_region
      %v638 = vmul.f32 %v90, %v90
      %v639 = vmul.f32 %v91, %v91
      %v640 = vmul.f32 %v92, %v92
      %v641 = vmul.f32 %v93, %v93
      %v642 = vmul.f32 %v94, %v94
      %v643 = vmul.f32 %v95, %v95
      %v644 = vmul.f32 %v96, %v96
      %v645 = vmul.f32 %v97, %v97
      %v646 = vadd.f32 %v638, %v639
      %v647 = vadd.f32 %v646, %v640
      %v648 = vadd.f32 %v647, %v641
      %v649 = vadd.f32 %v648, %v642
      %v650 = vadd.f32 %v649, %v643
      %v651 = vadd.f32 %v650, %v644
      %v652 = vadd.f32 %v651, %v645
      %653 = vadd.xlane.f32.xlu0 %v652
      %v654 = vpop.xlane.xlu0 %653
      %v655 = vld [vmem:[#allocation2] sm:$0xff]
      %v656 = vadd.f32 %v654, %v655
      %v657 = vmax.f32 %v656, 0.0
      %vm658 = vcmp.le.f32.partialorder %v657, 1.0
      %v659 = vpack.c.bf16 %v90, %v90
      %v660 = vpack.c.bf16 %v91, %v91
      %v661 = vpack.c.bf16 %v92, %v92
      %v662 = vpack.c.bf16 %v93, %v93
      %v663 = vpack.c.bf16 %v94, %v94
      %v664 = vpack.c.bf16 %v95, %v95
      %v665 = vpack.c.bf16 %v96, %v96
      %v666 = vpack.c.bf16 %v97, %v97
      %v667 = vld [vmem:[#allocation10] sm:$0xf]
      %v668 = vld [vmem:[#allocation10 + $0x4] sm:$0xf]
      %v669 = vld [vmem:[#allocation10 + $0x8] sm:$0xf]
      %v670 = vld [vmem:[#allocation10 + $0xc] sm:$0xf]
      %v671 = vld [vmem:[#allocation10 + $0x10] sm:$0xf]
      %v672 = vld [vmem:[#allocation10 + $0x14] sm:$0xf]
      %v673 = vld [vmem:[#allocation10 + $0x18] sm:$0xf]
      %v674 = vld [vmem:[#allocation10 + $0x1c] sm:$0xf]
      %v675 = vld [vmem:[#allocation10 + $0x20] sm:$0xf]
      %v676 = vld [vmem:[#allocation10 + $0x24] sm:$0xf]
      %v677 = vld [vmem:[#allocation10 + $0x28] sm:$0xf]
      %v678 = vld [vmem:[#allocation10 + $0x2c] sm:$0xf]
      %v679 = vld [vmem:[#allocation10 + $0x30] sm:$0xf]
      %v680 = vld [vmem:[#allocation10 + $0x34] sm:$0xf]
      %v681 = vld [vmem:[#allocation10 + $0x38] sm:$0xf]
      %v682 = vld [vmem:[#allocation10 + $0x3c] sm:$0xf]
      %v683 = vld [vmem:[#allocation10 + $0x40] sm:$0xf]
      %v684 = vld [vmem:[#allocation10 + $0x44] sm:$0xf]
      %v685 = vld [vmem:[#allocation10 + $0x48] sm:$0xf]
      %v686 = vld [vmem:[#allocation10 + $0x4c] sm:$0xf]
      %v687 = vld [vmem:[#allocation10 + $0x50] sm:$0xf]
      %v688 = vld [vmem:[#allocation10 + $0x54] sm:$0xf]
      %v689 = vld [vmem:[#allocation10 + $0x58] sm:$0xf]
      %v690 = vld [vmem:[#allocation10 + $0x5c] sm:$0xf]
      %v691 = vld [vmem:[#allocation10 + $0x60] sm:$0xf]
      %v692 = vld [vmem:[#allocation10 + $0x64] sm:$0xf]
      %v693 = vld [vmem:[#allocation10 + $0x68] sm:$0xf]
      %v694 = vld [vmem:[#allocation10 + $0x6c] sm:$0xf]
      %v695 = vld [vmem:[#allocation10 + $0x70] sm:$0xf]
      %v696 = vld [vmem:[#allocation10 + $0x74] sm:$0xf]
      %v697 = vld [vmem:[#allocation10 + $0x78] sm:$0xf]
      %v698 = vld [vmem:[#allocation10 + $0x7c] sm:$0xf]
      %v699 = vld [vmem:[#allocation10 + $0x80] sm:$0xf]
      %v700 = vld [vmem:[#allocation10 + $0x84] sm:$0xf]
      %v701 = vld [vmem:[#allocation10 + $0x88] sm:$0xf]
      %v702 = vld [vmem:[#allocation10 + $0x8c] sm:$0xf]
      %v703 = vld [vmem:[#allocation10 + $0x90] sm:$0xf]
      %v704 = vld [vmem:[#allocation10 + $0x94] sm:$0xf]
      %v705 = vld [vmem:[#allocation10 + $0x98] sm:$0xf]
      %v706 = vld [vmem:[#allocation10 + $0x9c] sm:$0xf]
      %v707 = vld [vmem:[#allocation10 + $0xa0] sm:$0xf]
      %v708 = vld [vmem:[#allocation10 + $0xa4] sm:$0xf]
      %v709 = vld [vmem:[#allocation10 + $0xa8] sm:$0xf]
      %v710 = vld [vmem:[#allocation10 + $0xac] sm:$0xf]
      %v711 = vld [vmem:[#allocation10 + $0xb0] sm:$0xf]
      %v712 = vld [vmem:[#allocation10 + $0xb4] sm:$0xf]
      %v713 = vld [vmem:[#allocation10 + $0xb8] sm:$0xf]
      %v714 = vld [vmem:[#allocation10 + $0xbc] sm:$0xf]
      %v715 = vld [vmem:[#allocation10 + $0xc0] sm:$0xf]
      %v716 = vld [vmem:[#allocation10 + $0xc4] sm:$0xf]
      %v717 = vld [vmem:[#allocation10 + $0xc8] sm:$0xf]
      %v718 = vld [vmem:[#allocation10 + $0xcc] sm:$0xf]
      %v719 = vld [vmem:[#allocation10 + $0xd0] sm:$0xf]
      %v720 = vld [vmem:[#allocation10 + $0xd4] sm:$0xf]
      %v721 = vld [vmem:[#allocation10 + $0xd8] sm:$0xf]
      %v722 = vld [vmem:[#allocation10 + $0xdc] sm:$0xf]
      %v723 = vld [vmem:[#allocation10 + $0xe0] sm:$0xf]
      %v724 = vld [vmem:[#allocation10 + $0xe4] sm:$0xf]
      %v725 = vld [vmem:[#allocation10 + $0xe8] sm:$0xf]
      %v726 = vld [vmem:[#allocation10 + $0xec] sm:$0xf]
      %v727 = vld [vmem:[#allocation10 + $0xf0] sm:$0xf]
      %v728 = vld [vmem:[#allocation10 + $0xf4] sm:$0xf]
      %v729 = vld [vmem:[#allocation10 + $0xf8] sm:$0xf]
      %v730 = vld [vmem:[#allocation10 + $0xfc] sm:$0xf]
      %v731 = vld [vmem:[#allocation10 + $0x100] sm:$0xf]
      %v732 = vld [vmem:[#allocation10 + $0x104] sm:$0xf]
      %v733 = vld [vmem:[#allocation10 + $0x108] sm:$0xf]
      %v734 = vld [vmem:[#allocation10 + $0x10c] sm:$0xf]
      %v735 = vld [vmem:[#allocation10 + $0x110] sm:$0xf]
      %v736 = vld [vmem:[#allocation10 + $0x114] sm:$0xf]
      %v737 = vld [vmem:[#allocation10 + $0x118] sm:$0xf]
      %v738 = vld [vmem:[#allocation10 + $0x11c] sm:$0xf]
      %v739 = vld [vmem:[#allocation10 + $0x120] sm:$0xf]
      %v740 = vld [vmem:[#allocation10 + $0x124] sm:$0xf]
      %v741 = vld [vmem:[#allocation10 + $0x128] sm:$0xf]
      %v742 = vld [vmem:[#allocation10 + $0x12c] sm:$0xf]
      %v743 = vld [vmem:[#allocation10 + $0x130] sm:$0xf]
      %v744 = vld [vmem:[#allocation10 + $0x134] sm:$0xf]
      %v745 = vld [vmem:[#allocation10 + $0x138] sm:$0xf]
      %v746 = vld [vmem:[#allocation10 + $0x13c] sm:$0xf]
      %v747 = vld [vmem:[#allocation10 + $0x140] sm:$0xf]
      %v748 = vld [vmem:[#allocation10 + $0x144] sm:$0xf]
      %v749 = vld [vmem:[#allocation10 + $0x148] sm:$0xf]
      %v750 = vld [vmem:[#allocation10 + $0x14c] sm:$0xf]
      %v751 = vld [vmem:[#allocation10 + $0x150] sm:$0xf]
      %v752 = vld [vmem:[#allocation10 + $0x154] sm:$0xf]
      %v753 = vld [vmem:[#allocation10 + $0x158] sm:$0xf]
      %v754 = vld [vmem:[#allocation10 + $0x15c] sm:$0xf]
      %v755 = vld [vmem:[#allocation10 + $0x160] sm:$0xf]
      %v756 = vld [vmem:[#allocation10 + $0x164] sm:$0xf]
      %v757 = vld [vmem:[#allocation10 + $0x168] sm:$0xf]
      %v758 = vld [vmem:[#allocation10 + $0x16c] sm:$0xf]
      %v759 = vld [vmem:[#allocation10 + $0x170] sm:$0xf]
      %v760 = vld [vmem:[#allocation10 + $0x174] sm:$0xf]
      %v761 = vld [vmem:[#allocation10 + $0x178] sm:$0xf]
      %v762 = vld [vmem:[#allocation10 + $0x17c] sm:$0xf]
      %v763 = vld [vmem:[#allocation10 + $0x180] sm:$0xf]
      %v764 = vld [vmem:[#allocation10 + $0x184] sm:$0xf]
      %v765 = vld [vmem:[#allocation10 + $0x188] sm:$0xf]
      %v766 = vld [vmem:[#allocation10 + $0x18c] sm:$0xf]
      %v767 = vld [vmem:[#allocation10 + $0x190] sm:$0xf]
      %v768 = vld [vmem:[#allocation10 + $0x194] sm:$0xf]
      %v769 = vld [vmem:[#allocation10 + $0x198] sm:$0xf]
      %v770 = vld [vmem:[#allocation10 + $0x19c] sm:$0xf]
      %v771 = vld [vmem:[#allocation10 + $0x1a0] sm:$0xf]
      %v772 = vld [vmem:[#allocation10 + $0x1a4] sm:$0xf]
      %v773 = vld [vmem:[#allocation10 + $0x1a8] sm:$0xf]
      %v774 = vld [vmem:[#allocation10 + $0x1ac] sm:$0xf]
      %v775 = vld [vmem:[#allocation10 + $0x1b0] sm:$0xf]
      %v776 = vld [vmem:[#allocation10 + $0x1b4] sm:$0xf]
      %v777 = vld [vmem:[#allocation10 + $0x1b8] sm:$0xf]
      %v778 = vld [vmem:[#allocation10 + $0x1bc] sm:$0xf]
      %v779 = vld [vmem:[#allocation10 + $0x1c0] sm:$0xf]
      %v780 = vld [vmem:[#allocation10 + $0x1c4] sm:$0xf]
      %v781 = vld [vmem:[#allocation10 + $0x1c8] sm:$0xf]
      %v782 = vld [vmem:[#allocation10 + $0x1cc] sm:$0xf]
      %v783 = vld [vmem:[#allocation10 + $0x1d0] sm:$0xf]
      %v784 = vld [vmem:[#allocation10 + $0x1d4] sm:$0xf]
      %v785 = vld [vmem:[#allocation10 + $0x1d8] sm:$0xf]
      %v786 = vld [vmem:[#allocation10 + $0x1dc] sm:$0xf]
      %v787 = vld [vmem:[#allocation10 + $0x1e0] sm:$0xf]
      %v788 = vld [vmem:[#allocation10 + $0x1e4] sm:$0xf]
      %v789 = vld [vmem:[#allocation10 + $0x1e8] sm:$0xf]
      %v790 = vld [vmem:[#allocation10 + $0x1ec] sm:$0xf]
      %v791 = vld [vmem:[#allocation10 + $0x1f0] sm:$0xf]
      %v792 = vld [vmem:[#allocation10 + $0x1f4] sm:$0xf]
      %v793 = vld [vmem:[#allocation10 + $0x1f8] sm:$0xf]
      %v794 = vld [vmem:[#allocation10 + $0x1fc] sm:$0xf]
      %v795 = vld [vmem:[%s5] sm:$0x1]
      %v797 = vlaneseq
      %v798 = vshrl.u32 %v797, 7
      %v799 = vsub.s32 0, %v798
      %v800 = vrot.slane %v795, %v799
      %v930 = vunpack.c.l.b16 %v667
      %v931 = vunpack.c.l.b16 %v668
      %v932 = vunpack.c.l.b16 %v669
      %v933 = vunpack.c.l.b16 %v670
      %v934 = vunpack.c.l.b16 %v671
      %v935 = vunpack.c.l.b16 %v672
      %v936 = vunpack.c.l.b16 %v673
      %v937 = vunpack.c.l.b16 %v674
      %v938 = vunpack.c.l.b16 %v675
      %v939 = vunpack.c.l.b16 %v676
      %v940 = vunpack.c.l.b16 %v677
      %v941 = vunpack.c.l.b16 %v678
      %v942 = vunpack.c.l.b16 %v679
      %v943 = vunpack.c.l.b16 %v680
      %v944 = vunpack.c.l.b16 %v681
      %v945 = vunpack.c.l.b16 %v682
      %v946 = vunpack.c.l.b16 %v683
      %v947 = vunpack.c.l.b16 %v684
      %v948 = vunpack.c.l.b16 %v685
      %v949 = vunpack.c.l.b16 %v686
      %v950 = vunpack.c.l.b16 %v687
      %v951 = vunpack.c.l.b16 %v688
      %v952 = vunpack.c.l.b16 %v689
      %v953 = vunpack.c.l.b16 %v690
      %v954 = vunpack.c.l.b16 %v691
      %v955 = vunpack.c.l.b16 %v692
      %v956 = vunpack.c.l.b16 %v693
      %v957 = vunpack.c.l.b16 %v694
      %v958 = vunpack.c.l.b16 %v695
      %v959 = vunpack.c.l.b16 %v696
      %v960 = vunpack.c.l.b16 %v697
      %v961 = vunpack.c.l.b16 %v698
      %v962 = vunpack.c.l.b16 %v699
      %v963 = vunpack.c.l.b16 %v700
      %v964 = vunpack.c.l.b16 %v701
      %v965 = vunpack.c.l.b16 %v702
      %v966 = vunpack.c.l.b16 %v703
      %v967 = vunpack.c.l.b16 %v704
      %v968 = vunpack.c.l.b16 %v705
      %v969 = vunpack.c.l.b16 %v706
      %v970 = vunpack.c.l.b16 %v707
      %v971 = vunpack.c.l.b16 %v708
      %v972 = vunpack.c.l.b16 %v709
      %v973 = vunpack.c.l.b16 %v710
      %v974 = vunpack.c.l.b16 %v711
      %v975 = vunpack.c.l.b16 %v712
      %v976 = vunpack.c.l.b16 %v713
      %v977 = vunpack.c.l.b16 %v714
      %v978 = vunpack.c.l.b16 %v715
      %v979 = vunpack.c.l.b16 %v716
      %v980 = vunpack.c.l.b16 %v717
      %v981 = vunpack.c.l.b16 %v718
      %v982 = vunpack.c.l.b16 %v719
      %v983 = vunpack.c.l.b16 %v720
      %v984 = vunpack.c.l.b16 %v721
      %v985 = vunpack.c.l.b16 %v722
      %v986 = vunpack.c.l.b16 %v723
      %v987 = vunpack.c.l.b16 %v724
      %v988 = vunpack.c.l.b16 %v725
      %v989 = vunpack.c.l.b16 %v726
      %v990 = vunpack.c.l.b16 %v727
      %v991 = vunpack.c.l.b16 %v728
      %v992 = vunpack.c.l.b16 %v729
      %v993 = vunpack.c.l.b16 %v730
      %v994 = vunpack.c.l.b16 %v731
      %v995 = vunpack.c.l.b16 %v732
      %v996 = vunpack.c.l.b16 %v733
      %v997 = vunpack.c.l.b16 %v734
      %v998 = vunpack.c.l.b16 %v735
      %v999 = vunpack.c.l.b16 %v736
      %v1000 = vunpack.c.l.b16 %v737
      %v1001 = vunpack.c.l.b16 %v738
      %v1002 = vunpack.c.l.b16 %v739
      %v1003 = vunpack.c.l.b16 %v740
      %v1004 = vunpack.c.l.b16 %v741
      %v1005 = vunpack.c.l.b16 %v742
      %v1006 = vunpack.c.l.b16 %v743
      %v1007 = vunpack.c.l.b16 %v744
      %v1008 = vunpack.c.l.b16 %v745
      %v1009 = vunpack.c.l.b16 %v746
      %v1010 = vunpack.c.l.b16 %v747
      %v1011 = vunpack.c.l.b16 %v748
      %v1012 = vunpack.c.l.b16 %v749
      %v1013 = vunpack.c.l.b16 %v750
      %v1014 = vunpack.c.l.b16 %v751
      %v1015 = vunpack.c.l.b16 %v752
      %v1016 = vunpack.c.l.b16 %v753
      %v1017 = vunpack.c.l.b16 %v754
      %v1018 = vunpack.c.l.b16 %v755
      %v1019 = vunpack.c.l.b16 %v756
      %v1020 = vunpack.c.l.b16 %v757
      %v1021 = vunpack.c.l.b16 %v758
      %v1022 = vunpack.c.l.b16 %v759
      %v1023 = vunpack.c.l.b16 %v760
      %v1024 = vunpack.c.l.b16 %v761
      %v1025 = vunpack.c.l.b16 %v762
      %v1026 = vunpack.c.l.b16 %v763
      %v1027 = vunpack.c.l.b16 %v764
      %v1028 = vunpack.c.l.b16 %v765
      %v1029 = vunpack.c.l.b16 %v766
      %v1030 = vunpack.c.l.b16 %v767
      %v1031 = vunpack.c.l.b16 %v768
      %v1032 = vunpack.c.l.b16 %v769
      %v1033 = vunpack.c.l.b16 %v770
      %v1034 = vunpack.c.l.b16 %v771
      %v1035 = vunpack.c.l.b16 %v772
      %v1036 = vunpack.c.l.b16 %v773
      %v1037 = vunpack.c.l.b16 %v774
      %v1038 = vunpack.c.l.b16 %v775
      %v1039 = vunpack.c.l.b16 %v776
      %v1040 = vunpack.c.l.b16 %v777
      %v1041 = vunpack.c.l.b16 %v778
      %v1042 = vunpack.c.l.b16 %v779
      %v1043 = vunpack.c.l.b16 %v780
      %v1044 = vunpack.c.l.b16 %v781
      %v1045 = vunpack.c.l.b16 %v782
      %v1046 = vunpack.c.l.b16 %v783
      %v1047 = vunpack.c.l.b16 %v784
      %v1048 = vunpack.c.l.b16 %v785
      %v1049 = vunpack.c.l.b16 %v786
      %v1050 = vunpack.c.l.b16 %v787
      %v1051 = vunpack.c.l.b16 %v788
      %v1052 = vunpack.c.l.b16 %v789
      %v1053 = vunpack.c.l.b16 %v790
      %v1054 = vunpack.c.l.b16 %v791
      %v1055 = vunpack.c.l.b16 %v792
      %v1056 = vunpack.c.l.b16 %v793
      %v1057 = vunpack.c.l.b16 %v794
      %v1058 = vpack.c.b16 %v931, %v930
      %v1059 = vpack.c.b16 %v933, %v932
      %v1060 = vpack.c.b16 %v935, %v934
      %v1061 = vpack.c.b16 %v937, %v936
      %v1062 = vpack.c.b16 %v939, %v938
      %v1063 = vpack.c.b16 %v941, %v940
      %v1064 = vpack.c.b16 %v943, %v942
      %v1065 = vpack.c.b16 %v945, %v944
      %v1066 = vpack.c.b16 %v947, %v946
      %v1067 = vpack.c.b16 %v949, %v948
      %v1068 = vpack.c.b16 %v951, %v950
      %v1069 = vpack.c.b16 %v953, %v952
      %v1070 = vpack.c.b16 %v955, %v954
      %v1071 = vpack.c.b16 %v957, %v956
      %v1072 = vpack.c.b16 %v959, %v958
      %v1073 = vpack.c.b16 %v961, %v960
      %v1074 = vpack.c.b16 %v963, %v962
      %v1075 = vpack.c.b16 %v965, %v964
      %v1076 = vpack.c.b16 %v967, %v966
      %v1077 = vpack.c.b16 %v969, %v968
      %v1078 = vpack.c.b16 %v971, %v970
      %v1079 = vpack.c.b16 %v973, %v972
      %v1080 = vpack.c.b16 %v975, %v974
      %v1081 = vpack.c.b16 %v977, %v976
      %v1082 = vpack.c.b16 %v979, %v978
      %v1083 = vpack.c.b16 %v981, %v980
      %v1084 = vpack.c.b16 %v983, %v982
      %v1085 = vpack.c.b16 %v985, %v984
      %v1086 = vpack.c.b16 %v987, %v986
      %v1087 = vpack.c.b16 %v989, %v988
      %v1088 = vpack.c.b16 %v991, %v990
      %v1089 = vpack.c.b16 %v993, %v992
      %v1090 = vpack.c.b16 %v995, %v994
      %v1091 = vpack.c.b16 %v997, %v996
      %v1092 = vpack.c.b16 %v999, %v998
      %v1093 = vpack.c.b16 %v1001, %v1000
      %v1094 = vpack.c.b16 %v1003, %v1002
      %v1095 = vpack.c.b16 %v1005, %v1004
      %v1096 = vpack.c.b16 %v1007, %v1006
      %v1097 = vpack.c.b16 %v1009, %v1008
      %v1098 = vpack.c.b16 %v1011, %v1010
      %v1099 = vpack.c.b16 %v1013, %v1012
      %v1100 = vpack.c.b16 %v1015, %v1014
      %v1101 = vpack.c.b16 %v1017, %v1016
      %v1102 = vpack.c.b16 %v1019, %v1018
      %v1103 = vpack.c.b16 %v1021, %v1020
      %v1104 = vpack.c.b16 %v1023, %v1022
      %v1105 = vpack.c.b16 %v1025, %v1024
      %v1106 = vpack.c.b16 %v1027, %v1026
      %v1107 = vpack.c.b16 %v1029, %v1028
      %v1108 = vpack.c.b16 %v1031, %v1030
      %v1109 = vpack.c.b16 %v1033, %v1032
      %v1110 = vpack.c.b16 %v1035, %v1034
      %v1111 = vpack.c.b16 %v1037, %v1036
      %v1112 = vpack.c.b16 %v1039, %v1038
      %v1113 = vpack.c.b16 %v1041, %v1040
      %v1114 = vpack.c.b16 %v1043, %v1042
      %v1115 = vpack.c.b16 %v1045, %v1044
      %v1116 = vpack.c.b16 %v1047, %v1046
      %v1117 = vpack.c.b16 %v1049, %v1048
      %v1118 = vpack.c.b16 %v1051, %v1050
      %v1119 = vpack.c.b16 %v1053, %v1052
      %v1120 = vpack.c.b16 %v1055, %v1054
      %v1121 = vpack.c.b16 %v1057, %v1056
      %1186 = vmatprep.subr.bf16.mxu0 0
      %1187 = vmatpush1.bf16.msra.mxu0 %v1065
      %1188 = vmatprep.subr.bf16.mxu0 0
      %1189 = vmatpush1.bf16.msra.mxu0 %v1064
      %1190 = vmatprep.subr.bf16.mxu0 0
      %1191 = vmatpush1.bf16.msra.mxu0 %v1063
      %1192 = vmatprep.subr.bf16.mxu0 0
      %1193 = vmatpush1.bf16.msra.mxu0 %v1062
      %1194 = vmatprep.subr.bf16.mxu0 0
      %1195 = vmatpush1.bf16.msra.mxu0 %v1061
      %1196 = vmatprep.subr.bf16.mxu0 0
      %1197 = vmatpush1.bf16.msra.mxu0 %v1060
      %1198 = vmatprep.subr.bf16.mxu0 0
      %1199 = vmatpush1.bf16.msra.mxu0 %v1059
      %1200 = vmatprep.subr.bf16.mxu0 0
      %1201 = vmatpush1.bf16.msra.mxu0 %v1058
      %1202 = vmatprep.subr.bf16.mxu0 0
      %1203 = vmatpush2.bf16.msra.mxu0 %v1073
      %1204 = vmatprep.subr.bf16.mxu0 0
      %1205 = vmatpush2.bf16.msra.mxu0 %v1072
      %1206 = vmatprep.subr.bf16.mxu0 0
      %1207 = vmatpush2.bf16.msra.mxu0 %v1071
      %1208 = vmatprep.subr.bf16.mxu0 0
      %1209 = vmatpush2.bf16.msra.mxu0 %v1070
      %1210 = vmatprep.subr.bf16.mxu0 0
      %1211 = vmatpush2.bf16.msra.mxu0 %v1069
      %1212 = vmatprep.subr.bf16.mxu0 0
      %1213 = vmatpush2.bf16.msra.mxu0 %v1068
      %1214 = vmatprep.subr.bf16.mxu0 0
      %1215 = vmatpush2.bf16.msra.mxu0 %v1067
      %1216 = vmatprep.subr.bf16.mxu0 0
      %1217 = vmatpush2.bf16.msra.mxu0 %v1066
      %1218 = vmatprep.mubr.bf16.mxu0 %v660
      %1219 = vmatmul.mubr.bf16.gmra.mxu0 %v659
      %v1220 = vpop.f32.mrf.mxu0
      %v1221 = vadd.f32 %v800, %v1220
      %v1222 = vpop.f32.mrf.mxu0
      %v1223 = vpop.f32.mrf.mxu0
      %v1224 = vpop.f32.mrf.mxu0
      %1225 = vdwg.mxu0
      %1226 = vmatprep.subr.bf16.mxu0 0
      %1227 = vmatpush1.bf16.msra.mxu0 %v1081
      %1228 = vmatprep.subr.bf16.mxu0 0
      %1229 = vmatpush1.bf16.msra.mxu0 %v1080
      %1230 = vmatprep.subr.bf16.mxu0 0
      %1231 = vmatpush1.bf16.msra.mxu0 %v1079
      %1232 = vmatprep.subr.bf16.mxu0 0
      %1233 = vmatpush1.bf16.msra.mxu0 %v1078
      %1234 = vmatprep.subr.bf16.mxu0 0
      %1235 = vmatpush1.bf16.msra.mxu0 %v1077
      %1236 = vmatprep.subr.bf16.mxu0 0
      %1237 = vmatpush1.bf16.msra.mxu0 %v1076
      %1238 = vmatprep.subr.bf16.mxu0 0
      %1239 = vmatpush1.bf16.msra.mxu0 %v1075
      %1240 = vmatprep.subr.bf16.mxu0 0
      %1241 = vmatpush1.bf16.msra.mxu0 %v1074
      %1242 = vmatprep.subr.bf16.mxu0 0
      %1243 = vmatpush2.bf16.msra.mxu0 %v1089
      %1244 = vmatprep.subr.bf16.mxu0 0
      %1245 = vmatpush2.bf16.msra.mxu0 %v1088
      %1246 = vmatprep.subr.bf16.mxu0 0
      %1247 = vmatpush2.bf16.msra.mxu0 %v1087
      %1248 = vmatprep.subr.bf16.mxu0 0
      %1249 = vmatpush2.bf16.msra.mxu0 %v1086
      %1250 = vmatprep.subr.bf16.mxu0 0
      %1251 = vmatpush2.bf16.msra.mxu0 %v1085
      %1252 = vmatprep.subr.bf16.mxu0 0
      %1253 = vmatpush2.bf16.msra.mxu0 %v1084
      %1254 = vmatprep.subr.bf16.mxu0 0
      %1255 = vmatpush2.bf16.msra.mxu0 %v1083
      %1256 = vmatprep.subr.bf16.mxu0 0
      %1257 = vmatpush2.bf16.msra.mxu0 %v1082
      %1258 = vmatprep.mubr.bf16.mxu0 %v662
      %1259 = vmatmul.mubr.bf16.gmra.mxu0 %v661
      %v1260 = vpop.f32.mrf.mxu0
      %v1261 = vadd.f32 %v1221, %v1260
      %v1262 = vpop.f32.mrf.mxu0
      %v1263 = vpop.f32.mrf.mxu0
      %v1264 = vpop.f32.mrf.mxu0
      %1265 = vdwg.mxu0
      %1266 = vmatprep.subr.bf16.mxu0 0
      %1267 = vmatpush1.bf16.msra.mxu0 %v1097
      %1268 = vmatprep.subr.bf16.mxu0 0
      %1269 = vmatpush1.bf16.msra.mxu0 %v1096
      %1270 = vmatprep.subr.bf16.mxu0 0
      %1271 = vmatpush1.bf16.msra.mxu0 %v1095
      %1272 = vmatprep.subr.bf16.mxu0 0
      %1273 = vmatpush1.bf16.msra.mxu0 %v1094
      %1274 = vmatprep.subr.bf16.mxu0 0
      %1275 = vmatpush1.bf16.msra.mxu0 %v1093
      %1276 = vmatprep.subr.bf16.mxu0 0
      %1277 = vmatpush1.bf16.msra.mxu0 %v1092
      %1278 = vmatprep.subr.bf16.mxu0 0
      %1279 = vmatpush1.bf16.msra.mxu0 %v1091
      %1280 = vmatprep.subr.bf16.mxu0 0
      %1281 = vmatpush1.bf16.msra.mxu0 %v1090
      %1282 = vmatprep.subr.bf16.mxu0 0
      %1283 = vmatpush2.bf16.msra.mxu0 %v1105
      %1284 = vmatprep.subr.bf16.mxu0 0
      %1285 = vmatpush2.bf16.msra.mxu0 %v1104
      %1286 = vmatprep.subr.bf16.mxu0 0
      %1287 = vmatpush2.bf16.msra.mxu0 %v1103
      %1288 = vmatprep.subr.bf16.mxu0 0
      %1289 = vmatpush2.bf16.msra.mxu0 %v1102
      %1290 = vmatprep.subr.bf16.mxu0 0
      %1291 = vmatpush2.bf16.msra.mxu0 %v1101
      %1292 = vmatprep.subr.bf16.mxu0 0
      %1293 = vmatpush2.bf16.msra.mxu0 %v1100
      %1294 = vmatprep.subr.bf16.mxu0 0
      %1295 = vmatpush2.bf16.msra.mxu0 %v1099
      %1296 = vmatprep.subr.bf16.mxu0 0
      %1297 = vmatpush2.bf16.msra.mxu0 %v1098
      %1298 = vmatprep.mubr.bf16.mxu0 %v664
      %1299 = vmatmul.mubr.bf16.gmra.mxu0 %v663
      %v1300 = vpop.f32.mrf.mxu0
      %v1301 = vadd.f32 %v1261, %v1300
      %v1302 = vpop.f32.mrf.mxu0
      %v1303 = vpop.f32.mrf.mxu0
      %v1304 = vpop.f32.mrf.mxu0
      %1305 = vdwg.mxu0
      %1306 = vmatprep.subr.bf16.mxu0 0
      %1307 = vmatpush1.bf16.msra.mxu0 %v1113
      %1308 = vmatprep.subr.bf16.mxu0 0
      %1309 = vmatpush1.bf16.msra.mxu0 %v1112
      %1310 = vmatprep.subr.bf16.mxu0 0
      %1311 = vmatpush1.bf16.msra.mxu0 %v1111
      %1312 = vmatprep.subr.bf16.mxu0 0
      %1313 = vmatpush1.bf16.msra.mxu0 %v1110
      %1314 = vmatprep.subr.bf16.mxu0 0
      %1315 = vmatpush1.bf16.msra.mxu0 %v1109
      %1316 = vmatprep.subr.bf16.mxu0 0
      %1317 = vmatpush1.bf16.msra.mxu0 %v1108
      %1318 = vmatprep.subr.bf16.mxu0 0
      %1319 = vmatpush1.bf16.msra.mxu0 %v1107
      %1320 = vmatprep.subr.bf16.mxu0 0
      %1321 = vmatpush1.bf16.msra.mxu0 %v1106
      %1322 = vmatprep.subr.bf16.mxu0 0
      %1323 = vmatpush2.bf16.msra.mxu0 %v1121
      %1324 = vmatprep.subr.bf16.mxu0 0
      %1325 = vmatpush2.bf16.msra.mxu0 %v1120
      %1326 = vmatprep.subr.bf16.mxu0 0
      %1327 = vmatpush2.bf16.msra.mxu0 %v1119
      %1328 = vmatprep.subr.bf16.mxu0 0
      %1329 = vmatpush2.bf16.msra.mxu0 %v1118
      %1330 = vmatprep.subr.bf16.mxu0 0
      %1331 = vmatpush2.bf16.msra.mxu0 %v1117
      %1332 = vmatprep.subr.bf16.mxu0 0
      %1333 = vmatpush2.bf16.msra.mxu0 %v1116
      %1334 = vmatprep.subr.bf16.mxu0 0
      %1335 = vmatpush2.bf16.msra.mxu0 %v1115
      %1336 = vmatprep.subr.bf16.mxu0 0
      %1337 = vmatpush2.bf16.msra.mxu0 %v1114
      %1338 = vmatprep.mubr.bf16.mxu0 %v666
      %1339 = vmatmul.mubr.bf16.gmra.mxu0 %v665
      %v1340 = vpop.f32.mrf.mxu0
      %v1341 = vadd.f32 %v1301, %v1340
      %v1342 = vpop.f32.mrf.mxu0
      %v1343 = vpop.f32.mrf.mxu0
      %v1344 = vpop.f32.mrf.mxu0
      %1345 = vdwg.mxu0
      %v1346 = vld [vmem:[#allocation3] sm:$0xff]
      %v1347 = vsel %vm658, 1, 0
      %1348 = vset.pattern.permute.xlu0 0
      %1349 = vperm.xlu0 %1348, %v1347
      %v1350 = vpop.permute.xlu0 %1349
      %vm1351 = vcmp.eq.s32.totalorder %v1350, 1
      %v1352 = vsel %vm1351, %v1346, %v1341
      %1353 = vmax.xlane.f32.xlu0 %v1352
      %v1354 = vpop.xlane.xlu0 %1353
      %v1355 = vsub.f32 %v1352, %v1354
      %v1356 = vmul.f32 %v1355, 1.442695
      %v1357 = vpow.pop %v1356
      %1358 = vadd.xlane.f32.xlu0 %v1357
      %v1359 = vpop.xlane.xlu0 %1358
      %v1360 = vrcp.pop %v1359
      %v1361 = vmul.f32 %v1357, %v1360
      %1362 = vst [vmem:[#allocation12] sm:$0xff] %v1361
      %vm1363 = vmpackc.low %vm1351, %vm1351
      %vm1364 = vmpackc.even %vm1363, %vm1363
      %v1365 = vsel %vm1364, 16843009, 0
      %1366 = vst [vmem:[#allocation13] sm:$0x3] %v1365
    $region49: #{tpu_custom_call.1} parent=1 // pred_fallthru
      _
    // Predicated region
    $region50: #{tpu_custom_call.1} parent=1 // pred_check
      _
    $region51: #{tpu_custom_call.1} parent=1 // pred_check_branch
      %1368 = sbr.rel (0) target = $region53
    $region52: #{tpu_custom_call.1} parent=1 // pred_region
      %s1370 = ssub.s32 128, 128
      %1371 = vsyncadd [#allocation6], %s1370
      %s1373 = sshll.u32 [#allocation12], 4
      %s1374 = int_to_ptr.vmem [resolvable:$true] %s1373
      %1376 = dma.vmem_to_hbm [thread:$0]  %s1374, 128, %s6, [#allocation6]
    $region53: #{tpu_custom_call.1} parent=1 // pred_fallthru
      _
    // Predicated region
    $region54: #{tpu_custom_call.1} parent=1 // pred_check
      _
    $region55: #{tpu_custom_call.1} parent=1 // pred_check_branch
      %1378 = sbr.rel (0) target = $region57
    $region56: #{tpu_custom_call.1} parent=1 // pred_region
      %s1380 = ssub.s32 32, 32
      %1381 = vsyncadd [#allocation14], %s1380
      %s1383 = sshll.u32 [#allocation13], 4
      %s1384 = int_to_ptr.vmem [resolvable:$true] %s1383
      %1386 = dma.vmem_to_hbm [thread:$0]  %s1384, 32, %s7, [#allocation14]
    $region57: #{tpu_custom_call.1} parent=1 // pred_fallthru
      _
    // Predicated region
    $region58: #{tpu_custom_call.1} parent=1 // pred_check
      _
    $region59: #{tpu_custom_call.1} parent=1 // pred_check_branch
      %1388 = sbr.rel (0) target = $region61
    $region60: #{tpu_custom_call.1} parent=1 // pred_region
      %1389 = dma.done [#allocation6], 128
    $region61: #{tpu_custom_call.1} parent=1 // pred_fallthru
      _
    // Predicated region
    $region62: #{tpu_custom_call.1} parent=1 // pred_check
      _
    $region63: #{tpu_custom_call.1} parent=1 // pred_check_branch
      %1391 = sbr.rel (0) target = $region65
    $region64: #{tpu_custom_call.1} parent=1 // pred_region
      %1392 = dma.done [#allocation14], 32
    $region65: #{tpu_custom_call.1} parent=1 // pred_fallthru
      _
    %1393 = vsyncpa [#allocation5], 1
    %1394 = vsyncpa [#allocation8], 1
    %1395 = vsyncpa [#allocation11], 1
    %1396 = vsyncpa [#allocation6], 1
    %1397 = vsyncpa [#allocation14], 1

</llo_original>
